<compile_context>
chip_gen: v5e
topology: v5e:2x2
jax: 0.10.0
libtpu: 0.0.40
codegen_flags: <defaults>
</compile_context>

<pallas_src>
import functools

import jax
import jax.numpy as jnp
from jax.experimental import pallas as pl
from jax.experimental.pallas import tpu as pltpu


def _round_up(x, m):
    return (x + m - 1) // m * m


def _fused_kernel(x_ref, w1_ref, b1_ref, w2_ref, b2_ref, mask_ref, o_ref,
                  y1_ref, *, offsets, guard, npix):
    """One image: conv1 + bias + ReLU -> conv2 + bias + ReLU, fully in VMEM.

    x_ref   : (1, CinP, Ltot)   bf16  guarded flat zero-padded input image
    w1_ref  : (9, CmidP, CinP)  bf16  tap-major conv1 weights
    b1_ref  : (CmidP, 1)        f32
    w2_ref  : (9, CoutP, CmidP) bf16  tap-major conv2 weights
    b2_ref  : (CoutP, 1)        f32
    mask_ref: (1, npix)         f32   1.0 at real pixels of the padded grid
    o_ref   : (1, CoutP, npix)  f32   conv2 output on the padded grid
    y1_ref  : (CmidP, Ltot)     bf16  VMEM scratch: guarded flat conv1 output
    """
    xv = x_ref[0]                          # (CinP, Ltot) bf16
    mask = mask_ref[...]                   # (1, npix) f32

    # ---- conv1: 9 tap dots on the MXU, f32 accumulation ----
    cmidp = y1_ref.shape[0]
    acc1 = jnp.zeros((cmidp, npix), jnp.float32)
    for t, off in enumerate(offsets):
        tap = xv[:, guard + off: guard + off + npix]           # (CinP, npix)
        acc1 = acc1 + jnp.dot(w1_ref[t], tap,
                              preferred_element_type=jnp.float32)
    # bias + ReLU, then zero the pad ring so conv2 sees proper zero padding.
    y1 = jnp.maximum(acc1 + b1_ref[...], 0.0) * mask           # (CmidP, npix)

    # Stage the guarded, padded conv1 activation in VMEM (never hits HBM).
    y1_ref[...] = jnp.zeros_like(y1_ref)
    y1_ref[:, guard: guard + npix] = y1.astype(y1_ref.dtype)

    # ---- conv2: 9 tap dots, f32 accumulation ----
    coutp = o_ref.shape[1]
    acc2 = jnp.zeros((coutp, npix), jnp.float32)
    for t, off in enumerate(offsets):
        tap = y1_ref[:, guard + off: guard + off + npix]       # (CmidP, npix)
        acc2 = acc2 + jnp.dot(w2_ref[t], tap,
                              preferred_element_type=jnp.float32)
    o_ref[0] = jnp.maximum(acc2 + b2_ref[...], 0.0)


def final_conv_block_forward(x_nchw, w1, b1, w2, b2):
    """x: (B, Cin, H, W); w1: (Cmid, Cin, 3, 3); w2: (Cout, Cmid, 3, 3)."""
    B, Cin, H, W = x_nchw.shape
    Cmid = w1.shape[0]
    Cout = w2.shape[0]

    Hp, Wp = H + 2, W + 2
    Np = Hp * Wp
    G = _round_up(Wp + 1, 128)            # lane-aligned guard band
    Ltot = Np + 2 * G
    CinP, CmidP, CoutP = (_round_up(c, 8) for c in (Cin, Cmid, Cout))

    f32, bf16 = jnp.float32, jnp.bfloat16

    # ---- glue: one guarded, padded, flattened bf16 copy of the input ----
    xg = jnp.pad(x_nchw.astype(bf16),
                 ((0, 0), (0, CinP - Cin), (1, 1), (1, 1)))
    xg = xg.reshape(B, CinP, Np)
    xg = jnp.pad(xg, ((0, 0), (0, 0), (G, G)))                 # (B, CinP, Ltot)

    # ---- weights / biases: tap-major, channel-padded ----
    def prep_w(w, co_p, ci_p):
        co, ci = w.shape[0], w.shape[1]
        wt = jnp.transpose(w, (2, 3, 0, 1)).reshape(9, co, ci)
        return jnp.pad(wt, ((0, 0), (0, co_p - co), (0, ci_p - ci))).astype(bf16)

    w1t = prep_w(w1, CmidP, CinP)
    w2t = prep_w(w2, CoutP, CmidP)
    b1c = jnp.pad(b1, (0, CmidP - Cmid)).reshape(CmidP, 1).astype(f32)
    b2c = jnp.pad(b2, (0, CoutP - Cout)).reshape(CoutP, 1).astype(f32)

    # interior mask on the padded grid (1 at real pixels, 0 on the pad ring)
    hh = jnp.arange(Hp)
    ww = jnp.arange(Wp)
    m = ((hh >= 1) & (hh <= H))[:, None] & ((ww >= 1) & (ww <= W))[None, :]
    mask = m.reshape(1, Np).astype(f32)

    # 3x3 tap offsets in the flattened padded grid
    offsets = tuple((dy - 1) * Wp + (dx - 1)
                    for dy in range(3) for dx in range(3))

    kernel = functools.partial(_fused_kernel, offsets=offsets, guard=G, npix=Np)

    out = pl.pallas_call(
        kernel,
        out_shape=jax.ShapeDtypeStruct((B, CoutP, Np), f32),
        grid_spec=pltpu.PrefetchScalarGridSpec(
            num_scalar_prefetch=0,
            grid=(B,),
            in_specs=[
                pl.BlockSpec((1, CinP, Ltot), lambda b: (b, 0, 0)),
                pl.BlockSpec((9, CmidP, CinP), lambda b: (0, 0, 0)),
                pl.BlockSpec((CmidP, 1), lambda b: (0, 0)),
                pl.BlockSpec((9, CoutP, CmidP), lambda b: (0, 0, 0)),
                pl.BlockSpec((CoutP, 1), lambda b: (0, 0)),
                pl.BlockSpec((1, Np), lambda b: (0, 0)),
            ],
            out_specs=pl.BlockSpec((1, CoutP, Np), lambda b: (b, 0, 0)),
            scratch_shapes=[pltpu.VMEM((CmidP, Ltot), bf16)],
        ),
        compiler_params=pltpu.CompilerParams(
            dimension_semantics=("parallel",)),
    )(xg, w1t, b1c, w2t, b2c, mask)

    # Already NCHW-ordered: drop padded channels, un-flatten, keep interior.
    out = out[:, :Cout, :].reshape(B, Cout, Hp, Wp)[:, :, 1:H + 1, 1:W + 1]
    return out


if __name__ == "__main__":
    key = jax.random.PRNGKey(0)
    B, Cin, Cout, H, W = 2, 4, 8, 16, 16
    k1, k2, k3, k4, k5 = jax.random.split(key, 5)
    x = jax.random.normal(k1, (B, Cin, H, W), jnp.float32)
    w1 = 0.1 * jax.random.normal(k2, (Cout, Cin, 3, 3), jnp.float32)
    b1 = 0.1 * jax.random.normal(k3, (Cout,), jnp.float32)
    w2 = 0.1 * jax.random.normal(k4, (Cout, Cout, 3, 3), jnp.float32)
    b2 = 0.1 * jax.random.normal(k5, (Cout,), jnp.float32)

    y = jax.jit(final_conv_block_forward)(x, w1, b1, w2, b2)
    y = jax.block_until_ready(y)

    # pure-JAX f32 reference (XLA convs) for a sanity check
    def conv_relu(z, w, b):
        z = jax.lax.conv_general_dilated(
            z, w, window_strides=(1, 1), padding=((1, 1), (1, 1)),
            dimension_numbers=("NCHW", "OIHW", "NCHW"))
        return jax.nn.relu(z + b.reshape(1, -1, 1, 1))

    ref = conv_relu(conv_relu(x, w1, b1), w2, b2)

    assert y.shape == (B, Cout, H, W), y.shape
    assert bool(jnp.all(jnp.isfinite(y)))
    err = float(jnp.max(jnp.abs(y - ref)))
    assert err < 5e-2, f"max abs err {err}"
    print("KERNEL_OK")
</pallas_src>

<mosaic_0001>
module attributes {stable_mosaic.version = 11 : i64} {
  func.func @_fused_kernel(%arg0: i32, %arg1: memref<1x8x580xbf16, #tpu.memory_space<vmem>>, %arg2: memref<9x8x8xbf16, #tpu.memory_space<vmem>>, %arg3: memref<8x1xf32, #tpu.memory_space<vmem>>, %arg4: memref<9x8x8xbf16, #tpu.memory_space<vmem>>, %arg5: memref<8x1xf32, #tpu.memory_space<vmem>>, %arg6: memref<1x324xf32, #tpu.memory_space<vmem>>, %arg7: memref<1x8x324xf32, #tpu.memory_space<vmem>>, %arg8: memref<8x580xbf16, #tpu.memory_space<vmem>>) attributes {dimension_semantics = [#tpu.dimension_semantics<parallel>], iteration_bounds = array<i64: 2>, scalar_prefetch = 0 : i64, scratch_operands = 1 : i64, tpu.core_type = #tpu.core_type<tc>, window_params = [{transform_indices = @transform_0, window_bounds = array<i64: 1, 8, 580>}, {pipeline_mode = #tpu.pipeline_mode<synchronous>, transform_indices = @transform_1, window_bounds = array<i64: 9, 8, 8>}, {pipeline_mode = #tpu.pipeline_mode<synchronous>, transform_indices = @transform_2, window_bounds = array<i64: 8, 1>}, {pipeline_mode = #tpu.pipeline_mode<synchronous>, transform_indices = @transform_3, window_bounds = array<i64: 9, 8, 8>}, {pipeline_mode = #tpu.pipeline_mode<synchronous>, transform_indices = @transform_4, window_bounds = array<i64: 8, 1>}, {pipeline_mode = #tpu.pipeline_mode<synchronous>, transform_indices = @transform_5, window_bounds = array<i64: 1, 324>}, {transform_indices = @transform_6, window_bounds = array<i64: 1, 8, 324>}]} {
    %c0 = arith.constant 0 : index
    %c0_0 = arith.constant 0 : index
    %c0_1 = arith.constant 0 : index
    %0 = vector.load %arg1[%c0, %c0_0, %c0_1] : memref<1x8x580xbf16, #tpu.memory_space<vmem>>, vector<1x8x580xbf16>
    %1 = vector.shape_cast %0 : vector<1x8x580xbf16> to vector<8x580xbf16>
    %c0_2 = arith.constant 0 : index
    %c0_3 = arith.constant 0 : index
    %2 = vector.load %arg6[%c0_2, %c0_3] : memref<1x324xf32, #tpu.memory_space<vmem>>, vector<1x324xf32>
    %cst = arith.constant 0.000000e+00 : f32
    %3 = vector.broadcast %cst : f32 to vector<8x324xf32>
    %4 = vector.extract_strided_slice %1 {offsets = [0, 109], sizes = [8, 324], strides = [1, 1]} : vector<8x580xbf16> to vector<8x324xbf16>
    %c0_4 = arith.constant 0 : index
    %c0_5 = arith.constant 0 : index
    %c0_6 = arith.constant 0 : index
    %5 = vector.load %arg2[%c0_4, %c0_5, %c0_6] : memref<9x8x8xbf16, #tpu.memory_space<vmem>>, vector<1x8x8xbf16>
    %6 = vector.shape_cast %5 : vector<1x8x8xbf16> to vector<8x8xbf16>
    %cst_7 = arith.constant dense<0.000000e+00> : vector<8x324xf32>
    %7 = tpu.matmul %6, %4, %cst_7 {dimension_numbers = #tpu.dot_dimension_numbers<[1], [0], [0], [1], [0, 0, 1, 1], [], []>} : vector<8x8xbf16>, vector<8x324xbf16>, vector<8x324xf32> -> vector<8x324xf32>
    %8 = arith.addf %3, %7 : vector<8x324xf32>
    %9 = vector.extract_strided_slice %1 {offsets = [0, 110], sizes = [8, 324], strides = [1, 1]} : vector<8x580xbf16> to vector<8x324xbf16>
    %c1 = arith.constant 1 : index
    %c0_8 = arith.constant 0 : index
    %c0_9 = arith.constant 0 : index
    %10 = vector.load %arg2[%c1, %c0_8, %c0_9] : memref<9x8x8xbf16, #tpu.memory_space<vmem>>, vector<1x8x8xbf16>
    %11 = vector.shape_cast %10 : vector<1x8x8xbf16> to vector<8x8xbf16>
    %cst_10 = arith.constant dense<0.000000e+00> : vector<8x324xf32>
    %12 = tpu.matmul %11, %9, %cst_10 {dimension_numbers = #tpu.dot_dimension_numbers<[1], [0], [0], [1], [0, 0, 1, 1], [], []>} : vector<8x8xbf16>, vector<8x324xbf16>, vector<8x324xf32> -> vector<8x324xf32>
    %13 = arith.addf %8, %12 : vector<8x324xf32>
    %14 = vector.extract_strided_slice %1 {offsets = [0, 111], sizes = [8, 324], strides = [1, 1]} : vector<8x580xbf16> to vector<8x324xbf16>
    %c2 = arith.constant 2 : index
    %c0_11 = arith.constant 0 : index
    %c0_12 = arith.constant 0 : index
    %15 = vector.load %arg2[%c2, %c0_11, %c0_12] : memref<9x8x8xbf16, #tpu.memory_space<vmem>>, vector<1x8x8xbf16>
    %16 = vector.shape_cast %15 : vector<1x8x8xbf16> to vector<8x8xbf16>
    %cst_13 = arith.constant dense<0.000000e+00> : vector<8x324xf32>
    %17 = tpu.matmul %16, %14, %cst_13 {dimension_numbers = #tpu.dot_dimension_numbers<[1], [0], [0], [1], [0, 0, 1, 1], [], []>} : vector<8x8xbf16>, vector<8x324xbf16>, vector<8x324xf32> -> vector<8x324xf32>
    %18 = arith.addf %13, %17 : vector<8x324xf32>
    %19 = vector.extract_strided_slice %1 {offsets = [0, 127], sizes = [8, 324], strides = [1, 1]} : vector<8x580xbf16> to vector<8x324xbf16>
    %c3 = arith.constant 3 : index
    %c0_14 = arith.constant 0 : index
    %c0_15 = arith.constant 0 : index
    %20 = vector.load %arg2[%c3, %c0_14, %c0_15] : memref<9x8x8xbf16, #tpu.memory_space<vmem>>, vector<1x8x8xbf16>
    %21 = vector.shape_cast %20 : vector<1x8x8xbf16> to vector<8x8xbf16>
    %cst_16 = arith.constant dense<0.000000e+00> : vector<8x324xf32>
    %22 = tpu.matmul %21, %19, %cst_16 {dimension_numbers = #tpu.dot_dimension_numbers<[1], [0], [0], [1], [0, 0, 1, 1], [], []>} : vector<8x8xbf16>, vector<8x324xbf16>, vector<8x324xf32> -> vector<8x324xf32>
    %23 = arith.addf %18, %22 : vector<8x324xf32>
    %24 = vector.extract_strided_slice %1 {offsets = [0, 128], sizes = [8, 324], strides = [1, 1]} : vector<8x580xbf16> to vector<8x324xbf16>
    %c4 = arith.constant 4 : index
    %c0_17 = arith.constant 0 : index
    %c0_18 = arith.constant 0 : index
    %25 = vector.load %arg2[%c4, %c0_17, %c0_18] : memref<9x8x8xbf16, #tpu.memory_space<vmem>>, vector<1x8x8xbf16>
    %26 = vector.shape_cast %25 : vector<1x8x8xbf16> to vector<8x8xbf16>
    %cst_19 = arith.constant dense<0.000000e+00> : vector<8x324xf32>
    %27 = tpu.matmul %26, %24, %cst_19 {dimension_numbers = #tpu.dot_dimension_numbers<[1], [0], [0], [1], [0, 0, 1, 1], [], []>} : vector<8x8xbf16>, vector<8x324xbf16>, vector<8x324xf32> -> vector<8x324xf32>
    %28 = arith.addf %23, %27 : vector<8x324xf32>
    %29 = vector.extract_strided_slice %1 {offsets = [0, 129], sizes = [8, 324], strides = [1, 1]} : vector<8x580xbf16> to vector<8x324xbf16>
    %c5 = arith.constant 5 : index
    %c0_20 = arith.constant 0 : index
    %c0_21 = arith.constant 0 : index
    %30 = vector.load %arg2[%c5, %c0_20, %c0_21] : memref<9x8x8xbf16, #tpu.memory_space<vmem>>, vector<1x8x8xbf16>
    %31 = vector.shape_cast %30 : vector<1x8x8xbf16> to vector<8x8xbf16>
    %cst_22 = arith.constant dense<0.000000e+00> : vector<8x324xf32>
    %32 = tpu.matmul %31, %29, %cst_22 {dimension_numbers = #tpu.dot_dimension_numbers<[1], [0], [0], [1], [0, 0, 1, 1], [], []>} : vector<8x8xbf16>, vector<8x324xbf16>, vector<8x324xf32> -> vector<8x324xf32>
    %33 = arith.addf %28, %32 : vector<8x324xf32>
    %34 = vector.extract_strided_slice %1 {offsets = [0, 145], sizes = [8, 324], strides = [1, 1]} : vector<8x580xbf16> to vector<8x324xbf16>
    %c6 = arith.constant 6 : index
    %c0_23 = arith.constant 0 : index
    %c0_24 = arith.constant 0 : index
    %35 = vector.load %arg2[%c6, %c0_23, %c0_24] : memref<9x8x8xbf16, #tpu.memory_space<vmem>>, vector<1x8x8xbf16>
    %36 = vector.shape_cast %35 : vector<1x8x8xbf16> to vector<8x8xbf16>
    %cst_25 = arith.constant dense<0.000000e+00> : vector<8x324xf32>
    %37 = tpu.matmul %36, %34, %cst_25 {dimension_numbers = #tpu.dot_dimension_numbers<[1], [0], [0], [1], [0, 0, 1, 1], [], []>} : vector<8x8xbf16>, vector<8x324xbf16>, vector<8x324xf32> -> vector<8x324xf32>
    %38 = arith.addf %33, %37 : vector<8x324xf32>
    %39 = vector.extract_strided_slice %1 {offsets = [0, 146], sizes = [8, 324], strides = [1, 1]} : vector<8x580xbf16> to vector<8x324xbf16>
    %c7 = arith.constant 7 : index
    %c0_26 = arith.constant 0 : index
    %c0_27 = arith.constant 0 : index
    %40 = vector.load %arg2[%c7, %c0_26, %c0_27] : memref<9x8x8xbf16, #tpu.memory_space<vmem>>, vector<1x8x8xbf16>
    %41 = vector.shape_cast %40 : vector<1x8x8xbf16> to vector<8x8xbf16>
    %cst_28 = arith.constant dense<0.000000e+00> : vector<8x324xf32>
    %42 = tpu.matmul %41, %39, %cst_28 {dimension_numbers = #tpu.dot_dimension_numbers<[1], [0], [0], [1], [0, 0, 1, 1], [], []>} : vector<8x8xbf16>, vector<8x324xbf16>, vector<8x324xf32> -> vector<8x324xf32>
    %43 = arith.addf %38, %42 : vector<8x324xf32>
    %44 = vector.extract_strided_slice %1 {offsets = [0, 147], sizes = [8, 324], strides = [1, 1]} : vector<8x580xbf16> to vector<8x324xbf16>
    %c8 = arith.constant 8 : index
    %c0_29 = arith.constant 0 : index
    %c0_30 = arith.constant 0 : index
    %45 = vector.load %arg2[%c8, %c0_29, %c0_30] : memref<9x8x8xbf16, #tpu.memory_space<vmem>>, vector<1x8x8xbf16>
    %46 = vector.shape_cast %45 : vector<1x8x8xbf16> to vector<8x8xbf16>
    %cst_31 = arith.constant dense<0.000000e+00> : vector<8x324xf32>
    %47 = tpu.matmul %46, %44, %cst_31 {dimension_numbers = #tpu.dot_dimension_numbers<[1], [0], [0], [1], [0, 0, 1, 1], [], []>} : vector<8x8xbf16>, vector<8x324xbf16>, vector<8x324xf32> -> vector<8x324xf32>
    %48 = arith.addf %43, %47 : vector<8x324xf32>
    %c0_32 = arith.constant 0 : index
    %c0_33 = arith.constant 0 : index
    %49 = vector.load %arg3[%c0_32, %c0_33] : memref<8x1xf32, #tpu.memory_space<vmem>>, vector<8x1xf32>
    %50 = vector.broadcast %49 : vector<8x1xf32> to vector<8x324xf32>
    %51 = arith.addf %48, %50 : vector<8x324xf32>
    %cst_34 = arith.constant 0.000000e+00 : f32
    %52 = vector.broadcast %cst_34 : f32 to vector<8x324xf32>
    %53 = arith.maximumf %51, %52 : vector<8x324xf32>
    %54 = vector.broadcast %2 : vector<1x324xf32> to vector<8x324xf32>
    %55 = arith.mulf %53, %54 : vector<8x324xf32>
    %cst_35 = arith.constant 0.000000e+00 : bf16
    %56 = vector.broadcast %cst_35 : bf16 to vector<8x580xbf16>
    %c0_36 = arith.constant 0 : index
    %c0_37 = arith.constant 0 : index
    %57 = vector.load %arg8[%c0_36, %c0_37] : memref<8x580xbf16, #tpu.memory_space<vmem>>, vector<8x580xbf16>
    tpu.vector_store %arg8[%c0_36, %c0_37], %56 {strides = array<i32>} : memref<8x580xbf16, #tpu.memory_space<vmem>>, vector<8x580xbf16>,
    %58 = arith.truncf %55 : vector<8x324xf32> to vector<8x324xbf16>
    %c0_38 = arith.constant 0 : index
    %c128 = arith.constant 128 : index
    %59 = vector.load %arg8[%c0_38, %c128] : memref<8x580xbf16, #tpu.memory_space<vmem>>, vector<8x324xbf16>
    tpu.vector_store %arg8[%c0_38, %c128], %58 {strides = array<i32>} : memref<8x580xbf16, #tpu.memory_space<vmem>>, vector<8x324xbf16>,
    %cst_39 = arith.constant 0.000000e+00 : f32
    %60 = vector.broadcast %cst_39 : f32 to vector<8x324xf32>
    %c0_40 = arith.constant 0 : index
    %c109 = arith.constant 109 : index
    %61 = vector.load %arg8[%c0_40, %c109] : memref<8x580xbf16, #tpu.memory_space<vmem>>, vector<8x324xbf16>
    %c0_41 = arith.constant 0 : index
    %c0_42 = arith.constant 0 : index
    %c0_43 = arith.constant 0 : index
    %62 = vector.load %arg4[%c0_41, %c0_42, %c0_43] : memref<9x8x8xbf16, #tpu.memory_space<vmem>>, vector<1x8x8xbf16>
    %63 = vector.shape_cast %62 : vector<1x8x8xbf16> to vector<8x8xbf16>
    %cst_44 = arith.constant dense<0.000000e+00> : vector<8x324xf32>
    %64 = tpu.matmul %63, %61, %cst_44 {dimension_numbers = #tpu.dot_dimension_numbers<[1], [0], [0], [1], [0, 0, 1, 1], [], []>} : vector<8x8xbf16>, vector<8x324xbf16>, vector<8x324xf32> -> vector<8x324xf32>
    %65 = arith.addf %60, %64 : vector<8x324xf32>
    %c0_45 = arith.constant 0 : index
    %c110 = arith.constant 110 : index
    %66 = vector.load %arg8[%c0_45, %c110] : memref<8x580xbf16, #tpu.memory_space<vmem>>, vector<8x324xbf16>
    %c1_46 = arith.constant 1 : index
    %c0_47 = arith.constant 0 : index
    %c0_48 = arith.constant 0 : index
    %67 = vector.load %arg4[%c1_46, %c0_47, %c0_48] : memref<9x8x8xbf16, #tpu.memory_space<vmem>>, vector<1x8x8xbf16>
    %68 = vector.shape_cast %67 : vector<1x8x8xbf16> to vector<8x8xbf16>
    %cst_49 = arith.constant dense<0.000000e+00> : vector<8x324xf32>
    %69 = tpu.matmul %68, %66, %cst_49 {dimension_numbers = #tpu.dot_dimension_numbers<[1], [0], [0], [1], [0, 0, 1, 1], [], []>} : vector<8x8xbf16>, vector<8x324xbf16>, vector<8x324xf32> -> vector<8x324xf32>
    %70 = arith.addf %65, %69 : vector<8x324xf32>
    %c0_50 = arith.constant 0 : index
    %c111 = arith.constant 111 : index
    %71 = vector.load %arg8[%c0_50, %c111] : memref<8x580xbf16, #tpu.memory_space<vmem>>, vector<8x324xbf16>
    %c2_51 = arith.constant 2 : index
    %c0_52 = arith.constant 0 : index
    %c0_53 = arith.constant 0 : index
    %72 = vector.load %arg4[%c2_51, %c0_52, %c0_53] : memref<9x8x8xbf16, #tpu.memory_space<vmem>>, vector<1x8x8xbf16>
    %73 = vector.shape_cast %72 : vector<1x8x8xbf16> to vector<8x8xbf16>
    %cst_54 = arith.constant dense<0.000000e+00> : vector<8x324xf32>
    %74 = tpu.matmul %73, %71, %cst_54 {dimension_numbers = #tpu.dot_dimension_numbers<[1], [0], [0], [1], [0, 0, 1, 1], [], []>} : vector<8x8xbf16>, vector<8x324xbf16>, vector<8x324xf32> -> vector<8x324xf32>
    %75 = arith.addf %70, %74 : vector<8x324xf32>
    %c0_55 = arith.constant 0 : index
    %c127 = arith.constant 127 : index
    %76 = vector.load %arg8[%c0_55, %c127] : memref<8x580xbf16, #tpu.memory_space<vmem>>, vector<8x324xbf16>
    %c3_56 = arith.constant 3 : index
    %c0_57 = arith.constant 0 : index
    %c0_58 = arith.constant 0 : index
    %77 = vector.load %arg4[%c3_56, %c0_57, %c0_58] : memref<9x8x8xbf16, #tpu.memory_space<vmem>>, vector<1x8x8xbf16>
    %78 = vector.shape_cast %77 : vector<1x8x8xbf16> to vector<8x8xbf16>
    %cst_59 = arith.constant dense<0.000000e+00> : vector<8x324xf32>
    %79 = tpu.matmul %78, %76, %cst_59 {dimension_numbers = #tpu.dot_dimension_numbers<[1], [0], [0], [1], [0, 0, 1, 1], [], []>} : vector<8x8xbf16>, vector<8x324xbf16>, vector<8x324xf32> -> vector<8x324xf32>
    %80 = arith.addf %75, %79 : vector<8x324xf32>
    %c0_60 = arith.constant 0 : index
    %c128_61 = arith.constant 128 : index
    %81 = vector.load %arg8[%c0_60, %c128_61] : memref<8x580xbf16, #tpu.memory_space<vmem>>, vector<8x324xbf16>
    %c4_62 = arith.constant 4 : index
    %c0_63 = arith.constant 0 : index
    %c0_64 = arith.constant 0 : index
    %82 = vector.load %arg4[%c4_62, %c0_63, %c0_64] : memref<9x8x8xbf16, #tpu.memory_space<vmem>>, vector<1x8x8xbf16>
    %83 = vector.shape_cast %82 : vector<1x8x8xbf16> to vector<8x8xbf16>
    %cst_65 = arith.constant dense<0.000000e+00> : vector<8x324xf32>
    %84 = tpu.matmul %83, %81, %cst_65 {dimension_numbers = #tpu.dot_dimension_numbers<[1], [0], [0], [1], [0, 0, 1, 1], [], []>} : vector<8x8xbf16>, vector<8x324xbf16>, vector<8x324xf32> -> vector<8x324xf32>
    %85 = arith.addf %80, %84 : vector<8x324xf32>
    %c0_66 = arith.constant 0 : index
    %c129 = arith.constant 129 : index
    %86 = vector.load %arg8[%c0_66, %c129] : memref<8x580xbf16, #tpu.memory_space<vmem>>, vector<8x324xbf16>
    %c5_67 = arith.constant 5 : index
    %c0_68 = arith.constant 0 : index
    %c0_69 = arith.constant 0 : index
    %87 = vector.load %arg4[%c5_67, %c0_68, %c0_69] : memref<9x8x8xbf16, #tpu.memory_space<vmem>>, vector<1x8x8xbf16>
    %88 = vector.shape_cast %87 : vector<1x8x8xbf16> to vector<8x8xbf16>
    %cst_70 = arith.constant dense<0.000000e+00> : vector<8x324xf32>
    %89 = tpu.matmul %88, %86, %cst_70 {dimension_numbers = #tpu.dot_dimension_numbers<[1], [0], [0], [1], [0, 0, 1, 1], [], []>} : vector<8x8xbf16>, vector<8x324xbf16>, vector<8x324xf32> -> vector<8x324xf32>
    %90 = arith.addf %85, %89 : vector<8x324xf32>
    %c0_71 = arith.constant 0 : index
    %c145 = arith.constant 145 : index
    %91 = vector.load %arg8[%c0_71, %c145] : memref<8x580xbf16, #tpu.memory_space<vmem>>, vector<8x324xbf16>
    %c6_72 = arith.constant 6 : index
    %c0_73 = arith.constant 0 : index
    %c0_74 = arith.constant 0 : index
    %92 = vector.load %arg4[%c6_72, %c0_73, %c0_74] : memref<9x8x8xbf16, #tpu.memory_space<vmem>>, vector<1x8x8xbf16>
    %93 = vector.shape_cast %92 : vector<1x8x8xbf16> to vector<8x8xbf16>
    %cst_75 = arith.constant dense<0.000000e+00> : vector<8x324xf32>
    %94 = tpu.matmul %93, %91, %cst_75 {dimension_numbers = #tpu.dot_dimension_numbers<[1], [0], [0], [1], [0, 0, 1, 1], [], []>} : vector<8x8xbf16>, vector<8x324xbf16>, vector<8x324xf32> -> vector<8x324xf32>
    %95 = arith.addf %90, %94 : vector<8x324xf32>
    %c0_76 = arith.constant 0 : index
    %c146 = arith.constant 146 : index
    %96 = vector.load %arg8[%c0_76, %c146] : memref<8x580xbf16, #tpu.memory_space<vmem>>, vector<8x324xbf16>
    %c7_77 = arith.constant 7 : index
    %c0_78 = arith.constant 0 : index
    %c0_79 = arith.constant 0 : index
    %97 = vector.load %arg4[%c7_77, %c0_78, %c0_79] : memref<9x8x8xbf16, #tpu.memory_space<vmem>>, vector<1x8x8xbf16>
    %98 = vector.shape_cast %97 : vector<1x8x8xbf16> to vector<8x8xbf16>
    %cst_80 = arith.constant dense<0.000000e+00> : vector<8x324xf32>
    %99 = tpu.matmul %98, %96, %cst_80 {dimension_numbers = #tpu.dot_dimension_numbers<[1], [0], [0], [1], [0, 0, 1, 1], [], []>} : vector<8x8xbf16>, vector<8x324xbf16>, vector<8x324xf32> -> vector<8x324xf32>
    %100 = arith.addf %95, %99 : vector<8x324xf32>
    %c0_81 = arith.constant 0 : index
    %c147 = arith.constant 147 : index
    %101 = vector.load %arg8[%c0_81, %c147] : memref<8x580xbf16, #tpu.memory_space<vmem>>, vector<8x324xbf16>
    %c8_82 = arith.constant 8 : index
    %c0_83 = arith.constant 0 : index
    %c0_84 = arith.constant 0 : index
    %102 = vector.load %arg4[%c8_82, %c0_83, %c0_84] : memref<9x8x8xbf16, #tpu.memory_space<vmem>>, vector<1x8x8xbf16>
    %103 = vector.shape_cast %102 : vector<1x8x8xbf16> to vector<8x8xbf16>
    %cst_85 = arith.constant dense<0.000000e+00> : vector<8x324xf32>
    %104 = tpu.matmul %103, %101, %cst_85 {dimension_numbers = #tpu.dot_dimension_numbers<[1], [0], [0], [1], [0, 0, 1, 1], [], []>} : vector<8x8xbf16>, vector<8x324xbf16>, vector<8x324xf32> -> vector<8x324xf32>
    %105 = arith.addf %100, %104 : vector<8x324xf32>
    %c0_86 = arith.constant 0 : index
    %c0_87 = arith.constant 0 : index
    %106 = vector.load %arg5[%c0_86, %c0_87] : memref<8x1xf32, #tpu.memory_space<vmem>>, vector<8x1xf32>
    %107 = vector.broadcast %106 : vector<8x1xf32> to vector<8x324xf32>
    %108 = arith.addf %105, %107 : vector<8x324xf32>
    %cst_88 = arith.constant 0.000000e+00 : f32
    %109 = vector.broadcast %cst_88 : f32 to vector<8x324xf32>
    %110 = arith.maximumf %108, %109 : vector<8x324xf32>
    %c0_89 = arith.constant 0 : index
    %c0_90 = arith.constant 0 : index
    %c0_91 = arith.constant 0 : index
    %111 = vector.load %arg7[%c0_89, %c0_90, %c0_91] : memref<1x8x324xf32, #tpu.memory_space<vmem>>, vector<1x8x324xf32>
    %112 = vector.shape_cast %111 : vector<1x8x324xf32> to vector<8x324xf32>
    %113 = vector.shape_cast %110 : vector<8x324xf32> to vector<1x8x324xf32>
    tpu.vector_store %arg7[%c0_89, %c0_90, %c0_91], %113 {strides = array<i32>} : memref<1x8x324xf32, #tpu.memory_space<vmem>>, vector<1x8x324xf32>,
    return
  }
  func.func @transform_0(%arg0: i32) -> (i32, i32, i32) {
    %c0_i32 = arith.constant 0 : i32
    %c0_i32_0 = arith.constant 0 : i32
    %c0_i32_1 = arith.constant 0 : i32
    return %arg0, %c0_i32, %c0_i32_0 : i32, i32, i32
  }
  func.func @transform_1(%arg0: i32) -> (i32, i32, i32) {
    %c0_i32 = arith.constant 0 : i32
    %c0_i32_0 = arith.constant 0 : i32
    %c0_i32_1 = arith.constant 0 : i32
    %c0_i32_2 = arith.constant 0 : i32
    return %c0_i32, %c0_i32_0, %c0_i32_1 : i32, i32, i32
  }
  func.func @transform_2(%arg0: i32) -> (i32, i32) {
    %c0_i32 = arith.constant 0 : i32
    %c0_i32_0 = arith.constant 0 : i32
    %c0_i32_1 = arith.constant 0 : i32
    return %c0_i32, %c0_i32_0 : i32, i32
  }
  func.func @transform_3(%arg0: i32) -> (i32, i32, i32) {
    %c0_i32 = arith.constant 0 : i32
    %c0_i32_0 = arith.constant 0 : i32
    %c0_i32_1 = arith.constant 0 : i32
    %c0_i32_2 = arith.constant 0 : i32
    return %c0_i32, %c0_i32_0, %c0_i32_1 : i32, i32, i32
  }
  func.func @transform_4(%arg0: i32) -> (i32, i32) {
    %c0_i32 = arith.constant 0 : i32
    %c0_i32_0 = arith.constant 0 : i32
    %c0_i32_1 = arith.constant 0 : i32
    return %c0_i32, %c0_i32_0 : i32, i32
  }
  func.func @transform_5(%arg0: i32) -> (i32, i32) {
    %c0_i32 = arith.constant 0 : i32
    %c0_i32_0 = arith.constant 0 : i32
    %c0_i32_1 = arith.constant 0 : i32
    return %c0_i32, %c0_i32_0 : i32, i32
  }
  func.func @transform_6(%arg0: i32) -> (i32, i32, i32) {
    %c0_i32 = arith.constant 0 : i32
    %c0_i32_0 = arith.constant 0 : i32
    %c0_i32_1 = arith.constant 0 : i32
    return %arg0, %c0_i32, %c0_i32_0 : i32, i32, i32
  }
}

</mosaic_0001>

<llo_original>
// kernel: final_conv_block_forward.1
$region0: #{final_conv_block_forward.1}
  #allocation0 [shape = 'u32[]', space=smem, size = 0x4, offset = 0x4, fixed_abs, tag = 'smem constant byte address 0x4 - core index']
  #allocation1 [shape = 'u32[72,128]{1,0:T(1,128)}', space=vmem, size = 0x9000, scoped, tag = 'internal scratch']
  #allocation2 [shape = 'bf16[8,580]{1,0:T(8,128)(2,1)}', space=vmem, size = 0x2800, scoped, tag = 'scratch operand']
  %s0 = inlined_call_operand.vmem [shape: bf16[2,8,580], index: 0, kind: input, shape index: {}]
  %s1 = inlined_call_operand.vmem [shape: bf16[9,8,8], index: 1, kind: input, shape index: {}]
  %s2 = inlined_call_operand.vmem [shape: f32[8,1], index: 2, kind: input, shape index: {}]
  %s3 = inlined_call_operand.vmem [shape: bf16[9,8,8], index: 3, kind: input, shape index: {}]
  %s4 = inlined_call_operand.vmem [shape: f32[8,1], index: 4, kind: input, shape index: {}]
  %s5 = inlined_call_operand.vmem [shape: f32[1,324], index: 5, kind: input, shape index: {}]
  %s6 = inlined_call_operand.vmem [shape: f32[2,8,324], index: 6, kind: output, shape index: {}]
  %s7 = sld [smem:[#allocation0]]
  $region57: #{final_conv_block_forward.1} parent=0
    _
  %s9 = ssub.s32 1, %s7
  %s10 = scalar_select 0, %s9, %s7
  loop: start=0, step=1, limit=4
  $region2: #{final_conv_block_forward.1} parent=0 // loop_pre_header
    _
  $region3: #{final_conv_block_forward.1} parent=0 // loop_header
    %s12 = sphi 0, %s16
    %p13 = scmp.ge.s32.totalorder %s12, 4
    %s22 = sphi 0, %s24
    %s25 = sphi 0, %s22
    %s26 = sphi 0, %s25
    %s42 = sphi 0, %s26
    %s46 = sphi 0, %s46
    %s48 = sphi 0, %s46
    %s49 = sphi 0, %s48
    %s63 = sphi 0, %s49
    %s67 = sphi 0, %s67
    %s69 = sphi 0, %s67
    %s70 = sphi 0, %s69
    %s84 = sphi 0, %s70
    %s88 = sphi 0, %s88
    %s90 = sphi 0, %s88
    %s91 = sphi 0, %s90
    %s105 = sphi 0, %s91
    %s109 = sphi 0, %s109
    %s111 = sphi 0, %s109
    %s112 = sphi 0, %s111
    %s126 = sphi 0, %s112
    %s130 = sphi 0, %s130
    %s132 = sphi 0, %s130
    %s133 = sphi 0, %s132
    %s147 = sphi 0, %s133
    %s153 = sphi 0, %s155
    %s156 = sphi 0, %s153
    %s157 = sphi 0, %s156
    %s173 = sphi 0, %s157
  $region4: #{final_conv_block_forward.1} parent=0 // loop_header_branch
    %15 = sbr.rel (%p13) target = $region8
  $region5: #{final_conv_block_forward.1} parent=0 // loop_body
    %s17 = ssub.s32 %s12, 1
    %s18 = ssub.s32 %s12, 2
    %s19 = sadd.s32 %s12, 1
    %s20 = ssub.s32 %s12, %s19
    %p21 = scmp.eq.s32.totalorder %s20, 0
    %s23 = sadd.s32 %s22, 1
    %s24 = scalar_select %p21, %s22, %s23
    %p27 = pneg %p21
    %p28 = scmp.eq.s32.totalorder %s12, 1
    %p29 = por %p27, %p28
    %p30 = scmp.ne.s32.totalorder %s22, %s25
    %p31 = scmp.eq.s32.totalorder %s12, 0
    %p32 = por %p30, %p31
    %p33 = scmp.ne.s32.totalorder %s22, %s25
    %p34 = scmp.eq.s32.totalorder %s17, 1
    %p35 = por %p33, %p34
    %p36 = scmp.ne.s32.totalorder %s25, %s26
    %p37 = scmp.eq.s32.totalorder %s17, 0
    %p38 = por %p36, %p37
    %p39 = scmp.ne.s32.totalorder %s25, %s26
    %p40 = scmp.eq.s32.totalorder %s18, 1
    %p41 = por %p39, %p40
    %p43 = scmp.ne.s32.totalorder %s26, %s42
    %p44 = scmp.eq.s32.totalorder %s18, 0
    %p45 = por %p43, %p44
    %s47 = sadd.s32 %s46, 1
    %p50 = scmp.eq.s32.totalorder %s12, 1
    %p51 = scmp.ne.s32.totalorder %s46, %s48
    %p52 = scmp.eq.s32.totalorder %s12, 0
    %p53 = por %p51, %p52
    %p54 = scmp.ne.s32.totalorder %s46, %s48
    %p55 = scmp.eq.s32.totalorder %s17, 1
    %p56 = por %p54, %p55
    %p57 = scmp.ne.s32.totalorder %s48, %s49
    %p58 = scmp.eq.s32.totalorder %s17, 0
    %p59 = por %p57, %p58
    %p60 = scmp.ne.s32.totalorder %s48, %s49
    %p61 = scmp.eq.s32.totalorder %s18, 1
    %p62 = por %p60, %p61
    %p64 = scmp.ne.s32.totalorder %s49, %s63
    %p65 = scmp.eq.s32.totalorder %s18, 0
    %p66 = por %p64, %p65
    %s68 = sadd.s32 %s67, 1
    %p71 = scmp.eq.s32.totalorder %s12, 1
    %p72 = scmp.ne.s32.totalorder %s67, %s69
    %p73 = scmp.eq.s32.totalorder %s12, 0
    %p74 = por %p72, %p73
    %p75 = scmp.ne.s32.totalorder %s67, %s69
    %p76 = scmp.eq.s32.totalorder %s17, 1
    %p77 = por %p75, %p76
    %p78 = scmp.ne.s32.totalorder %s69, %s70
    %p79 = scmp.eq.s32.totalorder %s17, 0
    %p80 = por %p78, %p79
    %p81 = scmp.ne.s32.totalorder %s69, %s70
    %p82 = scmp.eq.s32.totalorder %s18, 1
    %p83 = por %p81, %p82
    %p85 = scmp.ne.s32.totalorder %s70, %s84
    %p86 = scmp.eq.s32.totalorder %s18, 0
    %p87 = por %p85, %p86
    %s89 = sadd.s32 %s88, 1
    %p92 = scmp.eq.s32.totalorder %s12, 1
    %p93 = scmp.ne.s32.totalorder %s88, %s90
    %p94 = scmp.eq.s32.totalorder %s12, 0
    %p95 = por %p93, %p94
    %p96 = scmp.ne.s32.totalorder %s88, %s90
    %p97 = scmp.eq.s32.totalorder %s17, 1
    %p98 = por %p96, %p97
    %p99 = scmp.ne.s32.totalorder %s90, %s91
    %p100 = scmp.eq.s32.totalorder %s17, 0
    %p101 = por %p99, %p100
    %p102 = scmp.ne.s32.totalorder %s90, %s91
    %p103 = scmp.eq.s32.totalorder %s18, 1
    %p104 = por %p102, %p103
    %p106 = scmp.ne.s32.totalorder %s91, %s105
    %p107 = scmp.eq.s32.totalorder %s18, 0
    %p108 = por %p106, %p107
    %s110 = sadd.s32 %s109, 1
    %p113 = scmp.eq.s32.totalorder %s12, 1
    %p114 = scmp.ne.s32.totalorder %s109, %s111
    %p115 = scmp.eq.s32.totalorder %s12, 0
    %p116 = por %p114, %p115
    %p117 = scmp.ne.s32.totalorder %s109, %s111
    %p118 = scmp.eq.s32.totalorder %s17, 1
    %p119 = por %p117, %p118
    %p120 = scmp.ne.s32.totalorder %s111, %s112
    %p121 = scmp.eq.s32.totalorder %s17, 0
    %p122 = por %p120, %p121
    %p123 = scmp.ne.s32.totalorder %s111, %s112
    %p124 = scmp.eq.s32.totalorder %s18, 1
    %p125 = por %p123, %p124
    %p127 = scmp.ne.s32.totalorder %s112, %s126
    %p128 = scmp.eq.s32.totalorder %s18, 0
    %p129 = por %p127, %p128
    %s131 = sadd.s32 %s130, 1
    %p134 = scmp.eq.s32.totalorder %s12, 1
    %p135 = scmp.ne.s32.totalorder %s130, %s132
    %p136 = scmp.eq.s32.totalorder %s12, 0
    %p137 = por %p135, %p136
    %p138 = scmp.ne.s32.totalorder %s130, %s132
    %p139 = scmp.eq.s32.totalorder %s17, 1
    %p140 = por %p138, %p139
    %p141 = scmp.ne.s32.totalorder %s132, %s133
    %p142 = scmp.eq.s32.totalorder %s17, 0
    %p143 = por %p141, %p142
    %p144 = scmp.ne.s32.totalorder %s132, %s133
    %p145 = scmp.eq.s32.totalorder %s18, 1
    %p146 = por %p144, %p145
    %p148 = scmp.ne.s32.totalorder %s133, %s147
    %p149 = scmp.eq.s32.totalorder %s18, 0
    %p150 = por %p148, %p149
    %s151 = ssub.s32 %s12, %s19
    %p152 = scmp.eq.s32.totalorder %s151, 0
    %s154 = sadd.s32 %s153, 1
    %s155 = scalar_select %p152, %s153, %s154
    %p158 = pneg %p152
    %p159 = scmp.eq.s32.totalorder %s12, 1
    %p160 = por %p158, %p159
    %p161 = scmp.ne.s32.totalorder %s153, %s156
    %p162 = scmp.eq.s32.totalorder %s12, 0
    %p163 = por %p161, %p162
    %p164 = scmp.ne.s32.totalorder %s153, %s156
    %p165 = scmp.eq.s32.totalorder %s17, 1
    %p166 = por %p164, %p165
    %p167 = scmp.ne.s32.totalorder %s156, %s157
    %p168 = scmp.eq.s32.totalorder %s17, 0
    %p169 = por %p167, %p168
    %p170 = scmp.ne.s32.totalorder %s156, %s157
    %p171 = scmp.eq.s32.totalorder %s18, 1
    %p172 = por %p170, %p171
    %p174 = scmp.ne.s32.totalorder %s157, %s173
    %p175 = scmp.eq.s32.totalorder %s18, 0
    %p176 = por %p174, %p175
    %p177 = scmp.le.s32.totalorder 1, %s12
    %p178 = scmp.lt.s32.totalorder %s12, 3
    %p179 = pnand %p177, %p178
    %p180 = pneg %p179
    // Predicated region
    $region9: #{final_conv_block_forward.1} parent=5 // pred_check
      _
    $region10: #{final_conv_block_forward.1} parent=5 // pred_check_branch
      %182 = sbr.rel (%p179) target = $region12
    $region11: #{final_conv_block_forward.1} parent=5 // pred_region
      %s183 = ssub.s32 %s12, 1
      // Predicated region
      $region13: #{final_conv_block_forward.1} parent=11 // pred_check
        %p184 = pneg %p59
      $region14: #{final_conv_block_forward.1} parent=11 // pred_check_branch
        %186 = sbr.rel (%p184) target = $region16
      $region15: #{final_conv_block_forward.1} parent=11 // pred_region
        _
      $region16: #{final_conv_block_forward.1} parent=11 // pred_fallthru
        _
      // Predicated region
      $region17: #{final_conv_block_forward.1} parent=11 // pred_check
        %p187 = pneg %p80
      $region18: #{final_conv_block_forward.1} parent=11 // pred_check_branch
        %189 = sbr.rel (%p187) target = $region20
      $region19: #{final_conv_block_forward.1} parent=11 // pred_region
        _
      $region20: #{final_conv_block_forward.1} parent=11 // pred_fallthru
        _
      // Predicated region
      $region21: #{final_conv_block_forward.1} parent=11 // pred_check
        %p190 = pneg %p101
      $region22: #{final_conv_block_forward.1} parent=11 // pred_check_branch
        %192 = sbr.rel (%p190) target = $region24
      $region23: #{final_conv_block_forward.1} parent=11 // pred_region
        _
      $region24: #{final_conv_block_forward.1} parent=11 // pred_fallthru
        _
      // Predicated region
      $region25: #{final_conv_block_forward.1} parent=11 // pred_check
        %p193 = pneg %p122
      $region26: #{final_conv_block_forward.1} parent=11 // pred_check_branch
        %195 = sbr.rel (%p193) target = $region28
      $region27: #{final_conv_block_forward.1} parent=11 // pred_region
        _
      $region28: #{final_conv_block_forward.1} parent=11 // pred_fallthru
        _
      // Predicated region
      $region29: #{final_conv_block_forward.1} parent=11 // pred_check
        %p196 = pneg %p143
      $region30: #{final_conv_block_forward.1} parent=11 // pred_check_branch
        %198 = sbr.rel (%p196) target = $region32
      $region31: #{final_conv_block_forward.1} parent=11 // pred_region
        _
      $region32: #{final_conv_block_forward.1} parent=11 // pred_fallthru
        _
    $region12: #{final_conv_block_forward.1} parent=5 // pred_fallthru
      _
    %p199 = scmp.lt.s32.totalorder %s12, 2
    // Predicated region
    $region33: #{final_conv_block_forward.1} parent=5 // pred_check
      %p200 = pneg %p199
    $region34: #{final_conv_block_forward.1} parent=5 // pred_check_branch
      %202 = sbr.rel (%p200) target = $region36
    $region35: #{final_conv_block_forward.1} parent=5 // pred_region
      // Predicated region
      $region37: #{final_conv_block_forward.1} parent=35 // pred_check
        %p203 = pneg %p32
      $region38: #{final_conv_block_forward.1} parent=35 // pred_check_branch
        %205 = sbr.rel (%p203) target = $region40
      $region39: #{final_conv_block_forward.1} parent=35 // pred_region
        %p206 = scmp.lt.s32.totalorder %s12, 1
        %s207 = scalar_select %p206, %s12, 1
        %s208 = smul.addr %s207, 5
        %s209 = smul.addr %s208, 4
        %s210 = scalar_lea.vmem %s0, %s209
      $region40: #{final_conv_block_forward.1} parent=35 // pred_fallthru
        _
    $region36: #{final_conv_block_forward.1} parent=5 // pred_fallthru
      _
    %p211 = scmp.le.s32.totalorder 1, %s12
    %p212 = scmp.lt.s32.totalorder %s12, 3
    %p213 = pnand %p211, %p212
    %p214 = pneg %p213
    // Predicated region
    $region41: #{final_conv_block_forward.1} parent=5 // pred_check
      _
    $region42: #{final_conv_block_forward.1} parent=5 // pred_check_branch
      %216 = sbr.rel (%p213) target = $region44
    $region43: #{final_conv_block_forward.1} parent=5 // pred_region
      %s217 = ssub.s32 %s12, 1
      %p218 = scmp.lt.s32.totalorder %s17, 1
      %s219 = scalar_select %p218, %s17, 1
      %s220 = smul.addr %s219, 5
      %s221 = smul.addr %s220, 4
      %s222 = scalar_lea.vmem %s0, %s221
      %p223 = pneg %p38
      %p224 = pneg %p35
      %p225 = pneg %p59
      %p226 = pneg %p56
      %p227 = pneg %p80
      %p228 = pneg %p77
      %p229 = pneg %p101
      %p230 = pneg %p98
      %p231 = pneg %p122
      %p232 = pneg %p119
      %p233 = pneg %p143
      %p234 = pneg %p140
      %p235 = pneg %p169
      %p236 = pneg %p166
      %p237 = scmp.lt.s32.totalorder %s17, 1
      %s238 = scalar_select %p237, %s17, 1
      %s239 = smul.addr %s238, 3
      %s240 = smul.addr %s239, 8
      %s241 = scalar_lea.vmem %s6, %s240
      %p242 = scmp.lt.s32.totalorder %s17, 1
      %s243 = scalar_select %p242, %s17, 1
      %s244 = smul.addr %s243, 5
      %s245 = smul.addr %s244, 4
      %s246 = scalar_lea.vmem %s0, %s245
      %p247 = scmp.lt.s32.totalorder %s17, 1
      %s248 = scalar_select %p247, %s17, 1
      %s249 = smul.addr %s248, 3
      %s250 = smul.addr %s249, 8
      %s251 = scalar_lea.vmem %s6, %s250
      %v253 = vld [vmem:[%s246] sm:$0xff]
      %v254 = vld [vmem:[%s246 + $0x8] sm:$0xff]
      %v255 = vld [vmem:[%s5] sm:$0x7]
      %v256 = vld [vmem:[%s1] sm:$0xf]
      %s257 = scalar_lea.vmem %s1, 4
      %v258 = vld [vmem:[%s257] sm:$0xf]
      %v261 = vunpack.c.l.b16 %v253
      %v262 = vunpack.c.h.b16 %v253
      %v263 = vunpack.c.l.b16 %v254
      %v264 = vunpack.c.h.b16 %v254
      %v265 = vpack.c.b16 %v261, %v261
      %v266 = vpack.c.b16 %v262, %v262
      %v267 = vpack.c.b16 %v263, %v263
      %v268 = vpack.c.b16 %v264, %v264
      %269 = vrot.lane.b32.xlu0 %v265, 18
      %v270 = vpop.permute.xlu0 %269
      %271 = vrot.lane.b32.xlu0 %v266, 18
      %v272 = vpop.permute.xlu0 %271
      %273 = vrot.lane.b32.xlu0 %v267, 18
      %v274 = vpop.permute.xlu0 %273
      %275 = vrot.lane.b32.xlu0 %v268, 18
      %v276 = vpop.permute.xlu0 %275
      %vm277 = vcmask 146432
      %v278 = vsel %vm277, %v270, %v272
      %v279 = vsel %vm277, %v272, %v274
      %v280 = vsel %vm277, %v274, %v276
      %vm281 = vcmask 64512
      %v283 = vsel %vm281, %v258, 0
      %vm285 = vcmask 1043456
      %v287 = vsel %vm285, %v278, 0
      %v290 = vsel %vm285, %v279, 0
      %v293 = vsel %vm285, %v280, 0
      %295 = vmatpush.bf16.msra.mxu0 0
      %296 = vmatpush.bf16.msra.mxu0 0
      %297 = vmatpush.bf16.msra.mxu0 0
      %298 = vmatpush.bf16.msra.mxu0 0
      %299 = vmatpush.bf16.msra.mxu0 0
      %300 = vmatpush.bf16.msra.mxu0 0
      %301 = vmatpush.bf16.msra.mxu0 0
      %302 = vmatpush.bf16.msra.mxu0 %v287
      %303 = vmatmul.bf16.gmra.mxu0 %v283
      %v304 = vpop.f32.mrf.mxu0
      %v305 = vadd.f32 0.0, %v304
      %v306 = vpop.f32.mrf.mxu0
      %307 = vdwg.mxu0
      %308 = vmatpush.bf16.msra.mxu0 0
      %309 = vmatpush.bf16.msra.mxu0 0
      %310 = vmatpush.bf16.msra.mxu0 0
      %311 = vmatpush.bf16.msra.mxu0 0
      %312 = vmatpush.bf16.msra.mxu0 0
      %313 = vmatpush.bf16.msra.mxu0 0
      %314 = vmatpush.bf16.msra.mxu0 0
      %315 = vmatpush.bf16.msra.mxu0 %v290
      %316 = vmatmul.bf16.gmra.mxu0 %v283
      %v317 = vpop.f32.mrf.mxu0
      %v318 = vadd.f32 0.0, %v317
      %v319 = vpop.f32.mrf.mxu0
      %320 = vdwg.mxu0
      %321 = vmatpush.bf16.msra.mxu0 0
      %322 = vmatpush.bf16.msra.mxu0 0
      %323 = vmatpush.bf16.msra.mxu0 0
      %324 = vmatpush.bf16.msra.mxu0 0
      %325 = vmatpush.bf16.msra.mxu0 0
      %326 = vmatpush.bf16.msra.mxu0 0
      %327 = vmatpush.bf16.msra.mxu0 0
      %328 = vmatpush.bf16.msra.mxu0 %v293
      %329 = vmatmul.bf16.gmra.mxu0 %v283
      %v330 = vpop.f32.mrf.mxu0
      %v331 = vadd.f32 0.0, %v330
      %v332 = vpop.f32.mrf.mxu0
      %333 = vdwg.mxu0
      %334 = vrot.lane.b32.xlu0 %v265, 19
      %v335 = vpop.permute.xlu0 %334
      %336 = vrot.lane.b32.xlu0 %v266, 19
      %v337 = vpop.permute.xlu0 %336
      %338 = vrot.lane.b32.xlu0 %v267, 19
      %v339 = vpop.permute.xlu0 %338
      %340 = vrot.lane.b32.xlu0 %v268, 19
      %v341 = vpop.permute.xlu0 %340
      %vm342 = vcmask 154624
      %v343 = vsel %vm342, %v335, %v337
      %v344 = vsel %vm342, %v337, %v339
      %v345 = vsel %vm342, %v339, %v341
      %v347 = vsel %vm281, %v256, 0
      %v350 = vsel %vm285, %v343, 0
      %v353 = vsel %vm285, %v344, 0
      %v356 = vsel %vm285, %v345, 0
      %358 = vmatpush.bf16.msra.mxu0 0
      %359 = vmatpush.bf16.msra.mxu0 0
      %360 = vmatpush.bf16.msra.mxu0 0
      %361 = vmatpush.bf16.msra.mxu0 0
      %362 = vmatpush.bf16.msra.mxu0 0
      %363 = vmatpush.bf16.msra.mxu0 0
      %364 = vmatpush.bf16.msra.mxu0 0
      %365 = vmatpush.bf16.msra.mxu0 %v350
      %366 = vmatmul.bf16.gmra.mxu0 %v347
      %v367 = vpop.f32.mrf.mxu0
      %v368 = vadd.f32 %v305, %v367
      %v369 = vpop.f32.mrf.mxu0
      %370 = vdwg.mxu0
      %371 = vmatpush.bf16.msra.mxu0 0
      %372 = vmatpush.bf16.msra.mxu0 0
      %373 = vmatpush.bf16.msra.mxu0 0
      %374 = vmatpush.bf16.msra.mxu0 0
      %375 = vmatpush.bf16.msra.mxu0 0
      %376 = vmatpush.bf16.msra.mxu0 0
      %377 = vmatpush.bf16.msra.mxu0 0
      %378 = vmatpush.bf16.msra.mxu0 %v353
      %379 = vmatmul.bf16.gmra.mxu0 %v347
      %v380 = vpop.f32.mrf.mxu0
      %v381 = vadd.f32 %v318, %v380
      %v382 = vpop.f32.mrf.mxu0
      %383 = vdwg.mxu0
      %384 = vmatpush.bf16.msra.mxu0 0
      %385 = vmatpush.bf16.msra.mxu0 0
      %386 = vmatpush.bf16.msra.mxu0 0
      %387 = vmatpush.bf16.msra.mxu0 0
      %388 = vmatpush.bf16.msra.mxu0 0
      %389 = vmatpush.bf16.msra.mxu0 0
      %390 = vmatpush.bf16.msra.mxu0 0
      %391 = vmatpush.bf16.msra.mxu0 %v356
      %392 = vmatmul.bf16.gmra.mxu0 %v347
      %v393 = vpop.f32.mrf.mxu0
      %v394 = vadd.f32 %v331, %v393
      %v395 = vpop.f32.mrf.mxu0
      %396 = vdwg.mxu0
      %s397 = scalar_lea.vmem %s1, 8
      %v398 = vld [vmem:[%s397] sm:$0xf]
      %399 = vrot.lane.b32.xlu0 %v265, 17
      %v400 = vpop.permute.xlu0 %399
      %401 = vrot.lane.b32.xlu0 %v266, 17
      %v402 = vpop.permute.xlu0 %401
      %403 = vrot.lane.b32.xlu0 %v267, 17
      %v404 = vpop.permute.xlu0 %403
      %405 = vrot.lane.b32.xlu0 %v268, 17
      %v406 = vpop.permute.xlu0 %405
      %vm407 = vcmask 138240
      %v408 = vsel %vm407, %v400, %v402
      %v409 = vsel %vm407, %v402, %v404
      %v410 = vsel %vm407, %v404, %v406
      %v412 = vsel %vm281, %v398, 0
      %v415 = vsel %vm285, %v408, 0
      %v418 = vsel %vm285, %v409, 0
      %v421 = vsel %vm285, %v410, 0
      %423 = vmatpush.bf16.msra.mxu0 0
      %424 = vmatpush.bf16.msra.mxu0 0
      %425 = vmatpush.bf16.msra.mxu0 0
      %426 = vmatpush.bf16.msra.mxu0 0
      %427 = vmatpush.bf16.msra.mxu0 0
      %428 = vmatpush.bf16.msra.mxu0 0
      %429 = vmatpush.bf16.msra.mxu0 0
      %430 = vmatpush.bf16.msra.mxu0 %v415
      %431 = vmatmul.bf16.gmra.mxu0 %v412
      %v432 = vpop.f32.mrf.mxu0
      %v433 = vadd.f32 0.0, %v432
      %v434 = vpop.f32.mrf.mxu0
      %435 = vdwg.mxu0
      %436 = vmatpush.bf16.msra.mxu0 0
      %437 = vmatpush.bf16.msra.mxu0 0
      %438 = vmatpush.bf16.msra.mxu0 0
      %439 = vmatpush.bf16.msra.mxu0 0
      %440 = vmatpush.bf16.msra.mxu0 0
      %441 = vmatpush.bf16.msra.mxu0 0
      %442 = vmatpush.bf16.msra.mxu0 0
      %443 = vmatpush.bf16.msra.mxu0 %v418
      %444 = vmatmul.bf16.gmra.mxu0 %v412
      %v445 = vpop.f32.mrf.mxu0
      %v446 = vadd.f32 0.0, %v445
      %v447 = vpop.f32.mrf.mxu0
      %448 = vdwg.mxu0
      %449 = vmatpush.bf16.msra.mxu0 0
      %450 = vmatpush.bf16.msra.mxu0 0
      %451 = vmatpush.bf16.msra.mxu0 0
      %452 = vmatpush.bf16.msra.mxu0 0
      %453 = vmatpush.bf16.msra.mxu0 0
      %454 = vmatpush.bf16.msra.mxu0 0
      %455 = vmatpush.bf16.msra.mxu0 0
      %456 = vmatpush.bf16.msra.mxu0 %v421
      %457 = vmatmul.bf16.gmra.mxu0 %v412
      %v458 = vpop.f32.mrf.mxu0
      %v459 = vadd.f32 0.0, %v458
      %v460 = vpop.f32.mrf.mxu0
      %461 = vdwg.mxu0
      %v462 = vadd.f32 %v368, %v433
      %v463 = vadd.f32 %v381, %v446
      %v464 = vadd.f32 %v394, %v459
      %s465 = scalar_lea.vmem %s1, 12
      %v466 = vld [vmem:[%s465] sm:$0xf]
      %467 = vrot.lane.b32.xlu0 %v265, 1
      %v468 = vpop.permute.xlu0 %467
      %469 = vrot.lane.b32.xlu0 %v266, 1
      %v470 = vpop.permute.xlu0 %469
      %471 = vrot.lane.b32.xlu0 %v267, 1
      %v472 = vpop.permute.xlu0 %471
      %473 = vrot.lane.b32.xlu0 %v268, 1
      %v474 = vpop.permute.xlu0 %473
      %vm475 = vcmask 7168
      %v476 = vsel %vm475, %v468, %v470
      %v477 = vsel %vm475, %v470, %v472
      %v478 = vsel %vm475, %v472, %v474
      %v480 = vsel %vm281, %v466, 0
      %v483 = vsel %vm285, %v476, 0
      %v486 = vsel %vm285, %v477, 0
      %v489 = vsel %vm285, %v478, 0
      %491 = vmatpush.bf16.msra.mxu0 0
      %492 = vmatpush.bf16.msra.mxu0 0
      %493 = vmatpush.bf16.msra.mxu0 0
      %494 = vmatpush.bf16.msra.mxu0 0
      %495 = vmatpush.bf16.msra.mxu0 0
      %496 = vmatpush.bf16.msra.mxu0 0
      %497 = vmatpush.bf16.msra.mxu0 0
      %498 = vmatpush.bf16.msra.mxu0 %v483
      %499 = vmatmul.bf16.gmra.mxu0 %v480
      %v500 = vpop.f32.mrf.mxu0
      %v501 = vadd.f32 0.0, %v500
      %v502 = vpop.f32.mrf.mxu0
      %503 = vdwg.mxu0
      %504 = vmatpush.bf16.msra.mxu0 0
      %505 = vmatpush.bf16.msra.mxu0 0
      %506 = vmatpush.bf16.msra.mxu0 0
      %507 = vmatpush.bf16.msra.mxu0 0
      %508 = vmatpush.bf16.msra.mxu0 0
      %509 = vmatpush.bf16.msra.mxu0 0
      %510 = vmatpush.bf16.msra.mxu0 0
      %511 = vmatpush.bf16.msra.mxu0 %v486
      %512 = vmatmul.bf16.gmra.mxu0 %v480
      %v513 = vpop.f32.mrf.mxu0
      %v514 = vadd.f32 0.0, %v513
      %v515 = vpop.f32.mrf.mxu0
      %516 = vdwg.mxu0
      %517 = vmatpush.bf16.msra.mxu0 0
      %518 = vmatpush.bf16.msra.mxu0 0
      %519 = vmatpush.bf16.msra.mxu0 0
      %520 = vmatpush.bf16.msra.mxu0 0
      %521 = vmatpush.bf16.msra.mxu0 0
      %522 = vmatpush.bf16.msra.mxu0 0
      %523 = vmatpush.bf16.msra.mxu0 0
      %524 = vmatpush.bf16.msra.mxu0 %v489
      %525 = vmatmul.bf16.gmra.mxu0 %v480
      %v526 = vpop.f32.mrf.mxu0
      %v527 = vadd.f32 0.0, %v526
      %v528 = vpop.f32.mrf.mxu0
      %529 = vdwg.mxu0
      %v530 = vadd.f32 %v462, %v501
      %v531 = vadd.f32 %v463, %v514
      %v532 = vadd.f32 %v464, %v527
      %s533 = scalar_lea.vmem %s1, 16
      %v534 = vld [vmem:[%s533] sm:$0xf]
      %v536 = vsel %vm281, %v534, 0
      %v539 = vsel %vm285, %v266, 0
      %v542 = vsel %vm285, %v267, 0
      %v545 = vsel %vm285, %v268, 0
      %547 = vmatpush.bf16.msra.mxu0 0
      %548 = vmatpush.bf16.msra.mxu0 0
      %549 = vmatpush.bf16.msra.mxu0 0
      %550 = vmatpush.bf16.msra.mxu0 0
      %551 = vmatpush.bf16.msra.mxu0 0
      %552 = vmatpush.bf16.msra.mxu0 0
      %553 = vmatpush.bf16.msra.mxu0 0
      %554 = vmatpush.bf16.msra.mxu0 %v539
      %555 = vmatmul.bf16.gmra.mxu0 %v536
      %v556 = vpop.f32.mrf.mxu0
      %v557 = vadd.f32 0.0, %v556
      %v558 = vpop.f32.mrf.mxu0
      %559 = vdwg.mxu0
      %560 = vmatpush.bf16.msra.mxu0 0
      %561 = vmatpush.bf16.msra.mxu0 0
      %562 = vmatpush.bf16.msra.mxu0 0
      %563 = vmatpush.bf16.msra.mxu0 0
      %564 = vmatpush.bf16.msra.mxu0 0
      %565 = vmatpush.bf16.msra.mxu0 0
      %566 = vmatpush.bf16.msra.mxu0 0
      %567 = vmatpush.bf16.msra.mxu0 %v542
      %568 = vmatmul.bf16.gmra.mxu0 %v536
      %v569 = vpop.f32.mrf.mxu0
      %v570 = vadd.f32 0.0, %v569
      %v571 = vpop.f32.mrf.mxu0
      %572 = vdwg.mxu0
      %573 = vmatpush.bf16.msra.mxu0 0
      %574 = vmatpush.bf16.msra.mxu0 0
      %575 = vmatpush.bf16.msra.mxu0 0
      %576 = vmatpush.bf16.msra.mxu0 0
      %577 = vmatpush.bf16.msra.mxu0 0
      %578 = vmatpush.bf16.msra.mxu0 0
      %579 = vmatpush.bf16.msra.mxu0 0
      %580 = vmatpush.bf16.msra.mxu0 %v545
      %581 = vmatmul.bf16.gmra.mxu0 %v536
      %v582 = vpop.f32.mrf.mxu0
      %v583 = vadd.f32 0.0, %v582
      %v584 = vpop.f32.mrf.mxu0
      %585 = vdwg.mxu0
      %v586 = vadd.f32 %v530, %v557
      %v587 = vadd.f32 %v531, %v570
      %v588 = vadd.f32 %v532, %v583
      %s589 = scalar_lea.vmem %s1, 20
      %v590 = vld [vmem:[%s589] sm:$0xf]
      %591 = vrot.lane.b32.xlu0 %v266, 127
      %v592 = vpop.permute.xlu0 %591
      %593 = vrot.lane.b32.xlu0 %v267, 127
      %v594 = vpop.permute.xlu0 %593
      %595 = vrot.lane.b32.xlu0 %v268, 127
      %v596 = vpop.permute.xlu0 %595
      %vm597 = vcmask 1039360
      %v598 = vsel %vm597, %v592, %v594
      %v599 = vsel %vm597, %v594, %v596
      %v601 = vsel %vm281, %v590, 0
      %v604 = vsel %vm285, %v598, 0
      %v607 = vsel %vm285, %v599, 0
      %v610 = vsel %vm285, %v596, 0
      %612 = vmatpush.bf16.msra.mxu0 0
      %613 = vmatpush.bf16.msra.mxu0 0
      %614 = vmatpush.bf16.msra.mxu0 0
      %615 = vmatpush.bf16.msra.mxu0 0
      %616 = vmatpush.bf16.msra.mxu0 0
      %617 = vmatpush.bf16.msra.mxu0 0
      %618 = vmatpush.bf16.msra.mxu0 0
      %619 = vmatpush.bf16.msra.mxu0 %v604
      %620 = vmatmul.bf16.gmra.mxu0 %v601
      %v621 = vpop.f32.mrf.mxu0
      %v622 = vadd.f32 0.0, %v621
      %v623 = vpop.f32.mrf.mxu0
      %624 = vdwg.mxu0
      %625 = vmatpush.bf16.msra.mxu0 0
      %626 = vmatpush.bf16.msra.mxu0 0
      %627 = vmatpush.bf16.msra.mxu0 0
      %628 = vmatpush.bf16.msra.mxu0 0
      %629 = vmatpush.bf16.msra.mxu0 0
      %630 = vmatpush.bf16.msra.mxu0 0
      %631 = vmatpush.bf16.msra.mxu0 0
      %632 = vmatpush.bf16.msra.mxu0 %v607
      %633 = vmatmul.bf16.gmra.mxu0 %v601
      %v634 = vpop.f32.mrf.mxu0
      %v635 = vadd.f32 0.0, %v634
      %v636 = vpop.f32.mrf.mxu0
      %637 = vdwg.mxu0
      %638 = vmatpush.bf16.msra.mxu0 0
      %639 = vmatpush.bf16.msra.mxu0 0
      %640 = vmatpush.bf16.msra.mxu0 0
      %641 = vmatpush.bf16.msra.mxu0 0
      %642 = vmatpush.bf16.msra.mxu0 0
      %643 = vmatpush.bf16.msra.mxu0 0
      %644 = vmatpush.bf16.msra.mxu0 0
      %645 = vmatpush.bf16.msra.mxu0 %v610
      %646 = vmatmul.bf16.gmra.mxu0 %v601
      %v647 = vpop.f32.mrf.mxu0
      %v648 = vadd.f32 0.0, %v647
      %v649 = vpop.f32.mrf.mxu0
      %650 = vdwg.mxu0
      %v651 = vadd.f32 %v586, %v622
      %v652 = vadd.f32 %v587, %v635
      %v653 = vadd.f32 %v588, %v648
      %s654 = scalar_lea.vmem %s1, 24
      %v655 = vld [vmem:[%s654] sm:$0xf]
      %656 = vrot.lane.b32.xlu0 %v266, 111
      %v657 = vpop.permute.xlu0 %656
      %658 = vrot.lane.b32.xlu0 %v267, 111
      %v659 = vpop.permute.xlu0 %658
      %660 = vrot.lane.b32.xlu0 %v268, 111
      %v661 = vpop.permute.xlu0 %660
      %vm662 = vcmask 908288
      %v663 = vsel %vm662, %v657, %v659
      %v664 = vsel %vm662, %v659, %v661
      %v666 = vsel %vm281, %v655, 0
      %v669 = vsel %vm285, %v663, 0
      %v672 = vsel %vm285, %v664, 0
      %v675 = vsel %vm285, %v661, 0
      %677 = vmatpush.bf16.msra.mxu0 0
      %678 = vmatpush.bf16.msra.mxu0 0
      %679 = vmatpush.bf16.msra.mxu0 0
      %680 = vmatpush.bf16.msra.mxu0 0
      %681 = vmatpush.bf16.msra.mxu0 0
      %682 = vmatpush.bf16.msra.mxu0 0
      %683 = vmatpush.bf16.msra.mxu0 0
      %684 = vmatpush.bf16.msra.mxu0 %v669
      %685 = vmatmul.bf16.gmra.mxu0 %v666
      %v686 = vpop.f32.mrf.mxu0
      %v687 = vadd.f32 0.0, %v686
      %v688 = vpop.f32.mrf.mxu0
      %689 = vdwg.mxu0
      %690 = vmatpush.bf16.msra.mxu0 0
      %691 = vmatpush.bf16.msra.mxu0 0
      %692 = vmatpush.bf16.msra.mxu0 0
      %693 = vmatpush.bf16.msra.mxu0 0
      %694 = vmatpush.bf16.msra.mxu0 0
      %695 = vmatpush.bf16.msra.mxu0 0
      %696 = vmatpush.bf16.msra.mxu0 0
      %697 = vmatpush.bf16.msra.mxu0 %v672
      %698 = vmatmul.bf16.gmra.mxu0 %v666
      %v699 = vpop.f32.mrf.mxu0
      %v700 = vadd.f32 0.0, %v699
      %v701 = vpop.f32.mrf.mxu0
      %702 = vdwg.mxu0
      %703 = vmatpush.bf16.msra.mxu0 0
      %704 = vmatpush.bf16.msra.mxu0 0
      %705 = vmatpush.bf16.msra.mxu0 0
      %706 = vmatpush.bf16.msra.mxu0 0
      %707 = vmatpush.bf16.msra.mxu0 0
      %708 = vmatpush.bf16.msra.mxu0 0
      %709 = vmatpush.bf16.msra.mxu0 0
      %710 = vmatpush.bf16.msra.mxu0 %v675
      %711 = vmatmul.bf16.gmra.mxu0 %v666
      %v712 = vpop.f32.mrf.mxu0
      %v713 = vadd.f32 0.0, %v712
      %v714 = vpop.f32.mrf.mxu0
      %715 = vdwg.mxu0
      %v716 = vadd.f32 %v651, %v687
      %v717 = vadd.f32 %v652, %v700
      %v718 = vadd.f32 %v653, %v713
      %s719 = scalar_lea.vmem %s1, 28
      %v720 = vld [vmem:[%s719] sm:$0xf]
      %721 = vrot.lane.b32.xlu0 %v266, 110
      %v722 = vpop.permute.xlu0 %721
      %723 = vrot.lane.b32.xlu0 %v267, 110
      %v724 = vpop.permute.xlu0 %723
      %725 = vrot.lane.b32.xlu0 %v268, 110
      %v726 = vpop.permute.xlu0 %725
      %vm727 = vcmask 900096
      %v728 = vsel %vm727, %v722, %v724
      %v729 = vsel %vm727, %v724, %v726
      %v731 = vsel %vm281, %v720, 0
      %v734 = vsel %vm285, %v728, 0
      %v737 = vsel %vm285, %v729, 0
      %v740 = vsel %vm285, %v726, 0
      %742 = vmatpush.bf16.msra.mxu0 0
      %743 = vmatpush.bf16.msra.mxu0 0
      %744 = vmatpush.bf16.msra.mxu0 0
      %745 = vmatpush.bf16.msra.mxu0 0
      %746 = vmatpush.bf16.msra.mxu0 0
      %747 = vmatpush.bf16.msra.mxu0 0
      %748 = vmatpush.bf16.msra.mxu0 0
      %749 = vmatpush.bf16.msra.mxu0 %v734
      %750 = vmatmul.bf16.gmra.mxu0 %v731
      %v751 = vpop.f32.mrf.mxu0
      %v752 = vadd.f32 0.0, %v751
      %v753 = vpop.f32.mrf.mxu0
      %754 = vdwg.mxu0
      %755 = vmatpush.bf16.msra.mxu0 0
      %756 = vmatpush.bf16.msra.mxu0 0
      %757 = vmatpush.bf16.msra.mxu0 0
      %758 = vmatpush.bf16.msra.mxu0 0
      %759 = vmatpush.bf16.msra.mxu0 0
      %760 = vmatpush.bf16.msra.mxu0 0
      %761 = vmatpush.bf16.msra.mxu0 0
      %762 = vmatpush.bf16.msra.mxu0 %v737
      %763 = vmatmul.bf16.gmra.mxu0 %v731
      %v764 = vpop.f32.mrf.mxu0
      %v765 = vadd.f32 0.0, %v764
      %v766 = vpop.f32.mrf.mxu0
      %767 = vdwg.mxu0
      %768 = vmatpush.bf16.msra.mxu0 0
      %769 = vmatpush.bf16.msra.mxu0 0
      %770 = vmatpush.bf16.msra.mxu0 0
      %771 = vmatpush.bf16.msra.mxu0 0
      %772 = vmatpush.bf16.msra.mxu0 0
      %773 = vmatpush.bf16.msra.mxu0 0
      %774 = vmatpush.bf16.msra.mxu0 0
      %775 = vmatpush.bf16.msra.mxu0 %v740
      %776 = vmatmul.bf16.gmra.mxu0 %v731
      %v777 = vpop.f32.mrf.mxu0
      %v778 = vadd.f32 0.0, %v777
      %v779 = vpop.f32.mrf.mxu0
      %780 = vdwg.mxu0
      %v781 = vadd.f32 %v716, %v752
      %v782 = vadd.f32 %v717, %v765
      %v783 = vadd.f32 %v718, %v778
      %s784 = scalar_lea.vmem %s1, 32
      %v785 = vld [vmem:[%s784] sm:$0xf]
      %786 = vrot.lane.b32.xlu0 %v266, 109
      %v787 = vpop.permute.xlu0 %786
      %788 = vrot.lane.b32.xlu0 %v267, 109
      %v789 = vpop.permute.xlu0 %788
      %790 = vrot.lane.b32.xlu0 %v268, 109
      %v791 = vpop.permute.xlu0 %790
      %vm792 = vcmask 891904
      %v793 = vsel %vm792, %v787, %v789
      %v794 = vsel %vm792, %v789, %v791
      %v796 = vsel %vm281, %v785, 0
      %v799 = vsel %vm285, %v793, 0
      %v802 = vsel %vm285, %v794, 0
      %v805 = vsel %vm285, %v791, 0
      %807 = vmatpush.bf16.msra.mxu0 0
      %808 = vmatpush.bf16.msra.mxu0 0
      %809 = vmatpush.bf16.msra.mxu0 0
      %810 = vmatpush.bf16.msra.mxu0 0
      %811 = vmatpush.bf16.msra.mxu0 0
      %812 = vmatpush.bf16.msra.mxu0 0
      %813 = vmatpush.bf16.msra.mxu0 0
      %814 = vmatpush.bf16.msra.mxu0 %v799
      %815 = vmatmul.bf16.gmra.mxu0 %v796
      %v816 = vpop.f32.mrf.mxu0
      %v817 = vadd.f32 0.0, %v816
      %v818 = vpop.f32.mrf.mxu0
      %819 = vdwg.mxu0
      %820 = vmatpush.bf16.msra.mxu0 0
      %821 = vmatpush.bf16.msra.mxu0 0
      %822 = vmatpush.bf16.msra.mxu0 0
      %823 = vmatpush.bf16.msra.mxu0 0
      %824 = vmatpush.bf16.msra.mxu0 0
      %825 = vmatpush.bf16.msra.mxu0 0
      %826 = vmatpush.bf16.msra.mxu0 0
      %827 = vmatpush.bf16.msra.mxu0 %v802
      %828 = vmatmul.bf16.gmra.mxu0 %v796
      %v829 = vpop.f32.mrf.mxu0
      %v830 = vadd.f32 0.0, %v829
      %v831 = vpop.f32.mrf.mxu0
      %832 = vdwg.mxu0
      %833 = vmatpush.bf16.msra.mxu0 0
      %834 = vmatpush.bf16.msra.mxu0 0
      %835 = vmatpush.bf16.msra.mxu0 0
      %836 = vmatpush.bf16.msra.mxu0 0
      %837 = vmatpush.bf16.msra.mxu0 0
      %838 = vmatpush.bf16.msra.mxu0 0
      %839 = vmatpush.bf16.msra.mxu0 0
      %840 = vmatpush.bf16.msra.mxu0 %v805
      %841 = vmatmul.bf16.gmra.mxu0 %v796
      %v842 = vpop.f32.mrf.mxu0
      %v843 = vadd.f32 0.0, %v842
      %v844 = vpop.f32.mrf.mxu0
      %845 = vdwg.mxu0
      %v846 = vadd.f32 %v781, %v817
      %v847 = vadd.f32 %v782, %v830
      %v848 = vadd.f32 %v783, %v843
      %v849 = vld [vmem:[%s2] sm:$0xff]
      %851 = vset.pattern.permute.xlu0 0
      %852 = vperm.xlu0 %851, %v849
      %v853 = vpop.permute.xlu0 %852
      %v855 = vadd.f32 %v846, %v853
      %v856 = vadd.f32 %v847, %v853
      %v857 = vadd.f32 %v848, %v853
      %v858 = vmax.f32 %v855, 0.0
      %v859 = vmax.f32 %v856, 0.0
      %v860 = vmax.f32 %v857, 0.0
      %v862 = vperm.slane %v255, 0
      %v863 = vperm.slane %v255, 1
      %v864 = vperm.slane %v255, 2
      %v868 = vmul.f32 %v858, %v862
      %v869 = vmul.f32 %v859, %v863
      %v870 = vmul.f32 %v860, %v864
      %871 = vst [vmem:[#allocation2] sm:$0xff] 0
      %872 = vst [vmem:[#allocation2 + $0x8] sm:$0xff] 0
      %vm873 = vcmask 551936
      %874 = vst.msk [vmem:[#allocation2 + $0x10] sm:$0xf] %vm873, 0
      %v875 = vpack.c.bf16 %v869, %v868
      %v876 = vpack.c.bf16 %v870, %v870
      %877 = vst [vmem:[#allocation2 + $0x4] sm:$0xff] %v875
      %878 = vst.msk [vmem:[#allocation2 + $0xc] sm:$0xf] %vm873, %v876
      %v879 = vld [vmem:[#allocation2] sm:$0xff]
      %v880 = vld [vmem:[#allocation2 + $0x8] sm:$0xff]
      %v881 = vld [vmem:[%s3] sm:$0xf]
      %s882 = scalar_lea.vmem %s3, 4
      %v883 = vld [vmem:[%s882] sm:$0xf]
      %v886 = vunpack.c.l.b16 %v879
      %v887 = vunpack.c.h.b16 %v879
      %v888 = vunpack.c.l.b16 %v880
      %v889 = vunpack.c.h.b16 %v880
      %v890 = vpack.c.b16 %v886, %v886
      %v891 = vpack.c.b16 %v887, %v887
      %v892 = vpack.c.b16 %v888, %v888
      %v893 = vpack.c.b16 %v889, %v889
      %894 = vrot.lane.b32.xlu0 %v890, 18
      %v895 = vpop.permute.xlu0 %894
      %896 = vrot.lane.b32.xlu0 %v891, 18
      %v897 = vpop.permute.xlu0 %896
      %898 = vrot.lane.b32.xlu0 %v892, 18
      %v899 = vpop.permute.xlu0 %898
      %900 = vrot.lane.b32.xlu0 %v893, 18
      %v901 = vpop.permute.xlu0 %900
      %v902 = vsel %vm277, %v895, %v897
      %v903 = vsel %vm277, %v897, %v899
      %v904 = vsel %vm277, %v899, %v901
      %v906 = vsel %vm281, %v883, 0
      %v909 = vsel %vm285, %v902, 0
      %v912 = vsel %vm285, %v903, 0
      %v915 = vsel %vm285, %v904, 0
      %917 = vmatpush.bf16.msra.mxu0 0
      %918 = vmatpush.bf16.msra.mxu0 0
      %919 = vmatpush.bf16.msra.mxu0 0
      %920 = vmatpush.bf16.msra.mxu0 0
      %921 = vmatpush.bf16.msra.mxu0 0
      %922 = vmatpush.bf16.msra.mxu0 0
      %923 = vmatpush.bf16.msra.mxu0 0
      %924 = vmatpush.bf16.msra.mxu0 %v909
      %925 = vmatmul.bf16.gmra.mxu0 %v906
      %v926 = vpop.f32.mrf.mxu0
      %v927 = vadd.f32 0.0, %v926
      %v928 = vpop.f32.mrf.mxu0
      %929 = vdwg.mxu0
      %930 = vmatpush.bf16.msra.mxu0 0
      %931 = vmatpush.bf16.msra.mxu0 0
      %932 = vmatpush.bf16.msra.mxu0 0
      %933 = vmatpush.bf16.msra.mxu0 0
      %934 = vmatpush.bf16.msra.mxu0 0
      %935 = vmatpush.bf16.msra.mxu0 0
      %936 = vmatpush.bf16.msra.mxu0 0
      %937 = vmatpush.bf16.msra.mxu0 %v912
      %938 = vmatmul.bf16.gmra.mxu0 %v906
      %v939 = vpop.f32.mrf.mxu0
      %v940 = vadd.f32 0.0, %v939
      %v941 = vpop.f32.mrf.mxu0
      %942 = vdwg.mxu0
      %943 = vmatpush.bf16.msra.mxu0 0
      %944 = vmatpush.bf16.msra.mxu0 0
      %945 = vmatpush.bf16.msra.mxu0 0
      %946 = vmatpush.bf16.msra.mxu0 0
      %947 = vmatpush.bf16.msra.mxu0 0
      %948 = vmatpush.bf16.msra.mxu0 0
      %949 = vmatpush.bf16.msra.mxu0 0
      %950 = vmatpush.bf16.msra.mxu0 %v915
      %951 = vmatmul.bf16.gmra.mxu0 %v906
      %v952 = vpop.f32.mrf.mxu0
      %v953 = vadd.f32 0.0, %v952
      %v954 = vpop.f32.mrf.mxu0
      %955 = vdwg.mxu0
      %956 = vrot.lane.b32.xlu0 %v890, 19
      %v957 = vpop.permute.xlu0 %956
      %958 = vrot.lane.b32.xlu0 %v891, 19
      %v959 = vpop.permute.xlu0 %958
      %960 = vrot.lane.b32.xlu0 %v892, 19
      %v961 = vpop.permute.xlu0 %960
      %962 = vrot.lane.b32.xlu0 %v893, 19
      %v963 = vpop.permute.xlu0 %962
      %v964 = vsel %vm342, %v957, %v959
      %v965 = vsel %vm342, %v959, %v961
      %v966 = vsel %vm342, %v961, %v963
      %v968 = vsel %vm281, %v881, 0
      %v971 = vsel %vm285, %v964, 0
      %v974 = vsel %vm285, %v965, 0
      %v977 = vsel %vm285, %v966, 0
      %979 = vmatpush.bf16.msra.mxu0 0
      %980 = vmatpush.bf16.msra.mxu0 0
      %981 = vmatpush.bf16.msra.mxu0 0
      %982 = vmatpush.bf16.msra.mxu0 0
      %983 = vmatpush.bf16.msra.mxu0 0
      %984 = vmatpush.bf16.msra.mxu0 0
      %985 = vmatpush.bf16.msra.mxu0 0
      %986 = vmatpush.bf16.msra.mxu0 %v971
      %987 = vmatmul.bf16.gmra.mxu0 %v968
      %v988 = vpop.f32.mrf.mxu0
      %v989 = vadd.f32 %v927, %v988
      %v990 = vpop.f32.mrf.mxu0
      %991 = vdwg.mxu0
      %992 = vmatpush.bf16.msra.mxu0 0
      %993 = vmatpush.bf16.msra.mxu0 0
      %994 = vmatpush.bf16.msra.mxu0 0
      %995 = vmatpush.bf16.msra.mxu0 0
      %996 = vmatpush.bf16.msra.mxu0 0
      %997 = vmatpush.bf16.msra.mxu0 0
      %998 = vmatpush.bf16.msra.mxu0 0
      %999 = vmatpush.bf16.msra.mxu0 %v974
      %1000 = vmatmul.bf16.gmra.mxu0 %v968
      %v1001 = vpop.f32.mrf.mxu0
      %v1002 = vadd.f32 %v940, %v1001
      %v1003 = vpop.f32.mrf.mxu0
      %1004 = vdwg.mxu0
      %1005 = vmatpush.bf16.msra.mxu0 0
      %1006 = vmatpush.bf16.msra.mxu0 0
      %1007 = vmatpush.bf16.msra.mxu0 0
      %1008 = vmatpush.bf16.msra.mxu0 0
      %1009 = vmatpush.bf16.msra.mxu0 0
      %1010 = vmatpush.bf16.msra.mxu0 0
      %1011 = vmatpush.bf16.msra.mxu0 0
      %1012 = vmatpush.bf16.msra.mxu0 %v977
      %1013 = vmatmul.bf16.gmra.mxu0 %v968
      %v1014 = vpop.f32.mrf.mxu0
      %v1015 = vadd.f32 %v953, %v1014
      %v1016 = vpop.f32.mrf.mxu0
      %1017 = vdwg.mxu0
      %s1018 = scalar_lea.vmem %s3, 8
      %v1019 = vld [vmem:[%s1018] sm:$0xf]
      %1020 = vrot.lane.b32.xlu0 %v890, 17
      %v1021 = vpop.permute.xlu0 %1020
      %1022 = vrot.lane.b32.xlu0 %v891, 17
      %v1023 = vpop.permute.xlu0 %1022
      %1024 = vrot.lane.b32.xlu0 %v892, 17
      %v1025 = vpop.permute.xlu0 %1024
      %1026 = vrot.lane.b32.xlu0 %v893, 17
      %v1027 = vpop.permute.xlu0 %1026
      %v1028 = vsel %vm407, %v1021, %v1023
      %v1029 = vsel %vm407, %v1023, %v1025
      %v1030 = vsel %vm407, %v1025, %v1027
      %v1032 = vsel %vm281, %v1019, 0
      %v1035 = vsel %vm285, %v1028, 0
      %v1038 = vsel %vm285, %v1029, 0
      %v1041 = vsel %vm285, %v1030, 0
      %1043 = vmatpush.bf16.msra.mxu0 0
      %1044 = vmatpush.bf16.msra.mxu0 0
      %1045 = vmatpush.bf16.msra.mxu0 0
      %1046 = vmatpush.bf16.msra.mxu0 0
      %1047 = vmatpush.bf16.msra.mxu0 0
      %1048 = vmatpush.bf16.msra.mxu0 0
      %1049 = vmatpush.bf16.msra.mxu0 0
      %1050 = vmatpush.bf16.msra.mxu0 %v1035
      %1051 = vmatmul.bf16.gmra.mxu0 %v1032
      %v1052 = vpop.f32.mrf.mxu0
      %v1053 = vadd.f32 0.0, %v1052
      %v1054 = vpop.f32.mrf.mxu0
      %1055 = vdwg.mxu0
      %1056 = vmatpush.bf16.msra.mxu0 0
      %1057 = vmatpush.bf16.msra.mxu0 0
      %1058 = vmatpush.bf16.msra.mxu0 0
      %1059 = vmatpush.bf16.msra.mxu0 0
      %1060 = vmatpush.bf16.msra.mxu0 0
      %1061 = vmatpush.bf16.msra.mxu0 0
      %1062 = vmatpush.bf16.msra.mxu0 0
      %1063 = vmatpush.bf16.msra.mxu0 %v1038
      %1064 = vmatmul.bf16.gmra.mxu0 %v1032
      %v1065 = vpop.f32.mrf.mxu0
      %v1066 = vadd.f32 0.0, %v1065
      %v1067 = vpop.f32.mrf.mxu0
      %1068 = vdwg.mxu0
      %1069 = vmatpush.bf16.msra.mxu0 0
      %1070 = vmatpush.bf16.msra.mxu0 0
      %1071 = vmatpush.bf16.msra.mxu0 0
      %1072 = vmatpush.bf16.msra.mxu0 0
      %1073 = vmatpush.bf16.msra.mxu0 0
      %1074 = vmatpush.bf16.msra.mxu0 0
      %1075 = vmatpush.bf16.msra.mxu0 0
      %1076 = vmatpush.bf16.msra.mxu0 %v1041
      %1077 = vmatmul.bf16.gmra.mxu0 %v1032
      %v1078 = vpop.f32.mrf.mxu0
      %v1079 = vadd.f32 0.0, %v1078
      %v1080 = vpop.f32.mrf.mxu0
      %1081 = vdwg.mxu0
      %v1082 = vadd.f32 %v989, %v1053
      %v1083 = vadd.f32 %v1002, %v1066
      %v1084 = vadd.f32 %v1015, %v1079
      %s1085 = scalar_lea.vmem %s3, 12
      %v1086 = vld [vmem:[%s1085] sm:$0xf]
      %1087 = vrot.lane.b32.xlu0 %v890, 1
      %v1088 = vpop.permute.xlu0 %1087
      %1089 = vrot.lane.b32.xlu0 %v891, 1
      %v1090 = vpop.permute.xlu0 %1089
      %1091 = vrot.lane.b32.xlu0 %v892, 1
      %v1092 = vpop.permute.xlu0 %1091
      %1093 = vrot.lane.b32.xlu0 %v893, 1
      %v1094 = vpop.permute.xlu0 %1093
      %v1095 = vsel %vm475, %v1088, %v1090
      %v1096 = vsel %vm475, %v1090, %v1092
      %v1097 = vsel %vm475, %v1092, %v1094
      %v1099 = vsel %vm281, %v1086, 0
      %v1102 = vsel %vm285, %v1095, 0
      %v1105 = vsel %vm285, %v1096, 0
      %v1108 = vsel %vm285, %v1097, 0
      %1110 = vmatpush.bf16.msra.mxu0 0
      %1111 = vmatpush.bf16.msra.mxu0 0
      %1112 = vmatpush.bf16.msra.mxu0 0
      %1113 = vmatpush.bf16.msra.mxu0 0
      %1114 = vmatpush.bf16.msra.mxu0 0
      %1115 = vmatpush.bf16.msra.mxu0 0
      %1116 = vmatpush.bf16.msra.mxu0 0
      %1117 = vmatpush.bf16.msra.mxu0 %v1102
      %1118 = vmatmul.bf16.gmra.mxu0 %v1099
      %v1119 = vpop.f32.mrf.mxu0
      %v1120 = vadd.f32 0.0, %v1119
      %v1121 = vpop.f32.mrf.mxu0
      %1122 = vdwg.mxu0
      %1123 = vmatpush.bf16.msra.mxu0 0
      %1124 = vmatpush.bf16.msra.mxu0 0
      %1125 = vmatpush.bf16.msra.mxu0 0
      %1126 = vmatpush.bf16.msra.mxu0 0
      %1127 = vmatpush.bf16.msra.mxu0 0
      %1128 = vmatpush.bf16.msra.mxu0 0
      %1129 = vmatpush.bf16.msra.mxu0 0
      %1130 = vmatpush.bf16.msra.mxu0 %v1105
      %1131 = vmatmul.bf16.gmra.mxu0 %v1099
      %v1132 = vpop.f32.mrf.mxu0
      %v1133 = vadd.f32 0.0, %v1132
      %v1134 = vpop.f32.mrf.mxu0
      %1135 = vdwg.mxu0
      %1136 = vmatpush.bf16.msra.mxu0 0
      %1137 = vmatpush.bf16.msra.mxu0 0
      %1138 = vmatpush.bf16.msra.mxu0 0
      %1139 = vmatpush.bf16.msra.mxu0 0
      %1140 = vmatpush.bf16.msra.mxu0 0
      %1141 = vmatpush.bf16.msra.mxu0 0
      %1142 = vmatpush.bf16.msra.mxu0 0
      %1143 = vmatpush.bf16.msra.mxu0 %v1108
      %1144 = vmatmul.bf16.gmra.mxu0 %v1099
      %v1145 = vpop.f32.mrf.mxu0
      %v1146 = vadd.f32 0.0, %v1145
      %v1147 = vpop.f32.mrf.mxu0
      %1148 = vdwg.mxu0
      %v1149 = vadd.f32 %v1082, %v1120
      %v1150 = vadd.f32 %v1083, %v1133
      %v1151 = vadd.f32 %v1084, %v1146
      %v1152 = vld [vmem:[#allocation2 + $0x4] sm:$0xff]
      %v1153 = vld [vmem:[#allocation2 + $0xc] sm:$0xf]
      %s1154 = scalar_lea.vmem %s3, 16
      %v1155 = vld [vmem:[%s1154] sm:$0xf]
      %v1158 = vunpack.c.l.b16 %v1152
      %v1159 = vunpack.c.h.b16 %v1152
      %v1160 = vunpack.c.l.b16 %v1153
      %v1161 = vpack.c.b16 %v1158, %v1158
      %v1162 = vpack.c.b16 %v1159, %v1159
      %v1163 = vpack.c.b16 %v1160, %v1160
      %v1165 = vsel %vm281, %v1155, 0
      %v1168 = vsel %vm285, %v1161, 0
      %v1171 = vsel %vm285, %v1162, 0
      %v1174 = vsel %vm285, %v1163, 0
      %1176 = vmatpush.bf16.msra.mxu0 0
      %1177 = vmatpush.bf16.msra.mxu0 0
      %1178 = vmatpush.bf16.msra.mxu0 0
      %1179 = vmatpush.bf16.msra.mxu0 0
      %1180 = vmatpush.bf16.msra.mxu0 0
      %1181 = vmatpush.bf16.msra.mxu0 0
      %1182 = vmatpush.bf16.msra.mxu0 0
      %1183 = vmatpush.bf16.msra.mxu0 %v1168
      %1184 = vmatmul.bf16.gmra.mxu0 %v1165
      %v1185 = vpop.f32.mrf.mxu0
      %v1186 = vadd.f32 0.0, %v1185
      %v1187 = vpop.f32.mrf.mxu0
      %1188 = vdwg.mxu0
      %1189 = vmatpush.bf16.msra.mxu0 0
      %1190 = vmatpush.bf16.msra.mxu0 0
      %1191 = vmatpush.bf16.msra.mxu0 0
      %1192 = vmatpush.bf16.msra.mxu0 0
      %1193 = vmatpush.bf16.msra.mxu0 0
      %1194 = vmatpush.bf16.msra.mxu0 0
      %1195 = vmatpush.bf16.msra.mxu0 0
      %1196 = vmatpush.bf16.msra.mxu0 %v1171
      %1197 = vmatmul.bf16.gmra.mxu0 %v1165
      %v1198 = vpop.f32.mrf.mxu0
      %v1199 = vadd.f32 0.0, %v1198
      %v1200 = vpop.f32.mrf.mxu0
      %1201 = vdwg.mxu0
      %1202 = vmatpush.bf16.msra.mxu0 0
      %1203 = vmatpush.bf16.msra.mxu0 0
      %1204 = vmatpush.bf16.msra.mxu0 0
      %1205 = vmatpush.bf16.msra.mxu0 0
      %1206 = vmatpush.bf16.msra.mxu0 0
      %1207 = vmatpush.bf16.msra.mxu0 0
      %1208 = vmatpush.bf16.msra.mxu0 0
      %1209 = vmatpush.bf16.msra.mxu0 %v1174
      %1210 = vmatmul.bf16.gmra.mxu0 %v1165
      %v1211 = vpop.f32.mrf.mxu0
      %v1212 = vadd.f32 0.0, %v1211
      %v1213 = vpop.f32.mrf.mxu0
      %1214 = vdwg.mxu0
      %v1215 = vadd.f32 %v1149, %v1186
      %v1216 = vadd.f32 %v1150, %v1199
      %v1217 = vadd.f32 %v1151, %v1212
      %s1218 = scalar_lea.vmem %s3, 20
      %v1219 = vld [vmem:[%s1218] sm:$0xf]
      %1220 = vrot.lane.b32.xlu0 %v1161, 127
      %v1221 = vpop.permute.xlu0 %1220
      %1222 = vrot.lane.b32.xlu0 %v1162, 127
      %v1223 = vpop.permute.xlu0 %1222
      %1224 = vrot.lane.b32.xlu0 %v1163, 127
      %v1225 = vpop.permute.xlu0 %1224
      %v1226 = vsel %vm597, %v1221, %v1223
      %v1227 = vsel %vm597, %v1223, %v1225
      %v1229 = vsel %vm281, %v1219, 0
      %v1232 = vsel %vm285, %v1226, 0
      %v1235 = vsel %vm285, %v1227, 0
      %v1238 = vsel %vm285, %v1225, 0
      %1240 = vmatpush.bf16.msra.mxu0 0
      %1241 = vmatpush.bf16.msra.mxu0 0
      %1242 = vmatpush.bf16.msra.mxu0 0
      %1243 = vmatpush.bf16.msra.mxu0 0
      %1244 = vmatpush.bf16.msra.mxu0 0
      %1245 = vmatpush.bf16.msra.mxu0 0
      %1246 = vmatpush.bf16.msra.mxu0 0
      %1247 = vmatpush.bf16.msra.mxu0 %v1232
      %1248 = vmatmul.bf16.gmra.mxu0 %v1229
      %v1249 = vpop.f32.mrf.mxu0
      %v1250 = vadd.f32 0.0, %v1249
      %v1251 = vpop.f32.mrf.mxu0
      %1252 = vdwg.mxu0
      %1253 = vmatpush.bf16.msra.mxu0 0
      %1254 = vmatpush.bf16.msra.mxu0 0
      %1255 = vmatpush.bf16.msra.mxu0 0
      %1256 = vmatpush.bf16.msra.mxu0 0
      %1257 = vmatpush.bf16.msra.mxu0 0
      %1258 = vmatpush.bf16.msra.mxu0 0
      %1259 = vmatpush.bf16.msra.mxu0 0
      %1260 = vmatpush.bf16.msra.mxu0 %v1235
      %1261 = vmatmul.bf16.gmra.mxu0 %v1229
      %v1262 = vpop.f32.mrf.mxu0
      %v1263 = vadd.f32 0.0, %v1262
      %v1264 = vpop.f32.mrf.mxu0
      %1265 = vdwg.mxu0
      %1266 = vmatpush.bf16.msra.mxu0 0
      %1267 = vmatpush.bf16.msra.mxu0 0
      %1268 = vmatpush.bf16.msra.mxu0 0
      %1269 = vmatpush.bf16.msra.mxu0 0
      %1270 = vmatpush.bf16.msra.mxu0 0
      %1271 = vmatpush.bf16.msra.mxu0 0
      %1272 = vmatpush.bf16.msra.mxu0 0
      %1273 = vmatpush.bf16.msra.mxu0 %v1238
      %1274 = vmatmul.bf16.gmra.mxu0 %v1229
      %v1275 = vpop.f32.mrf.mxu0
      %v1276 = vadd.f32 0.0, %v1275
      %v1277 = vpop.f32.mrf.mxu0
      %1278 = vdwg.mxu0
      %v1279 = vadd.f32 %v1215, %v1250
      %v1280 = vadd.f32 %v1216, %v1263
      %v1281 = vadd.f32 %v1217, %v1276
      %s1282 = scalar_lea.vmem %s3, 24
      %v1283 = vld [vmem:[%s1282] sm:$0xf]
      %1284 = vrot.lane.b32.xlu0 %v1161, 111
      %v1285 = vpop.permute.xlu0 %1284
      %1286 = vrot.lane.b32.xlu0 %v1162, 111
      %v1287 = vpop.permute.xlu0 %1286
      %1288 = vrot.lane.b32.xlu0 %v1163, 111
      %v1289 = vpop.permute.xlu0 %1288
      %v1290 = vsel %vm662, %v1285, %v1287
      %v1291 = vsel %vm662, %v1287, %v1289
      %v1293 = vsel %vm281, %v1283, 0
      %v1296 = vsel %vm285, %v1290, 0
      %v1299 = vsel %vm285, %v1291, 0
      %v1302 = vsel %vm285, %v1289, 0
      %1304 = vmatpush.bf16.msra.mxu0 0
      %1305 = vmatpush.bf16.msra.mxu0 0
      %1306 = vmatpush.bf16.msra.mxu0 0
      %1307 = vmatpush.bf16.msra.mxu0 0
      %1308 = vmatpush.bf16.msra.mxu0 0
      %1309 = vmatpush.bf16.msra.mxu0 0
      %1310 = vmatpush.bf16.msra.mxu0 0
      %1311 = vmatpush.bf16.msra.mxu0 %v1296
      %1312 = vmatmul.bf16.gmra.mxu0 %v1293
      %v1313 = vpop.f32.mrf.mxu0
      %v1314 = vadd.f32 0.0, %v1313
      %v1315 = vpop.f32.mrf.mxu0
      %1316 = vdwg.mxu0
      %1317 = vmatpush.bf16.msra.mxu0 0
      %1318 = vmatpush.bf16.msra.mxu0 0
      %1319 = vmatpush.bf16.msra.mxu0 0
      %1320 = vmatpush.bf16.msra.mxu0 0
      %1321 = vmatpush.bf16.msra.mxu0 0
      %1322 = vmatpush.bf16.msra.mxu0 0
      %1323 = vmatpush.bf16.msra.mxu0 0
      %1324 = vmatpush.bf16.msra.mxu0 %v1299
      %1325 = vmatmul.bf16.gmra.mxu0 %v1293
      %v1326 = vpop.f32.mrf.mxu0
      %v1327 = vadd.f32 0.0, %v1326
      %v1328 = vpop.f32.mrf.mxu0
      %1329 = vdwg.mxu0
      %1330 = vmatpush.bf16.msra.mxu0 0
      %1331 = vmatpush.bf16.msra.mxu0 0
      %1332 = vmatpush.bf16.msra.mxu0 0
      %1333 = vmatpush.bf16.msra.mxu0 0
      %1334 = vmatpush.bf16.msra.mxu0 0
      %1335 = vmatpush.bf16.msra.mxu0 0
      %1336 = vmatpush.bf16.msra.mxu0 0
      %1337 = vmatpush.bf16.msra.mxu0 %v1302
      %1338 = vmatmul.bf16.gmra.mxu0 %v1293
      %v1339 = vpop.f32.mrf.mxu0
      %v1340 = vadd.f32 0.0, %v1339
      %v1341 = vpop.f32.mrf.mxu0
      %1342 = vdwg.mxu0
      %v1343 = vadd.f32 %v1279, %v1314
      %v1344 = vadd.f32 %v1280, %v1327
      %v1345 = vadd.f32 %v1281, %v1340
      %s1346 = scalar_lea.vmem %s3, 28
      %v1347 = vld [vmem:[%s1346] sm:$0xf]
      %1348 = vrot.lane.b32.xlu0 %v1161, 110
      %v1349 = vpop.permute.xlu0 %1348
      %1350 = vrot.lane.b32.xlu0 %v1162, 110
      %v1351 = vpop.permute.xlu0 %1350
      %1352 = vrot.lane.b32.xlu0 %v1163, 110
      %v1353 = vpop.permute.xlu0 %1352
      %v1354 = vsel %vm727, %v1349, %v1351
      %v1355 = vsel %vm727, %v1351, %v1353
      %v1357 = vsel %vm281, %v1347, 0
      %v1360 = vsel %vm285, %v1354, 0
      %v1363 = vsel %vm285, %v1355, 0
      %v1366 = vsel %vm285, %v1353, 0
      %1368 = vmatpush.bf16.msra.mxu0 0
      %1369 = vmatpush.bf16.msra.mxu0 0
      %1370 = vmatpush.bf16.msra.mxu0 0
      %1371 = vmatpush.bf16.msra.mxu0 0
      %1372 = vmatpush.bf16.msra.mxu0 0
      %1373 = vmatpush.bf16.msra.mxu0 0
      %1374 = vmatpush.bf16.msra.mxu0 0
      %1375 = vmatpush.bf16.msra.mxu0 %v1360
      %1376 = vmatmul.bf16.gmra.mxu0 %v1357
      %v1377 = vpop.f32.mrf.mxu0
      %v1378 = vadd.f32 0.0, %v1377
      %v1379 = vpop.f32.mrf.mxu0
      %1380 = vdwg.mxu0
      %1381 = vmatpush.bf16.msra.mxu0 0
      %1382 = vmatpush.bf16.msra.mxu0 0
      %1383 = vmatpush.bf16.msra.mxu0 0
      %1384 = vmatpush.bf16.msra.mxu0 0
      %1385 = vmatpush.bf16.msra.mxu0 0
      %1386 = vmatpush.bf16.msra.mxu0 0
      %1387 = vmatpush.bf16.msra.mxu0 0
      %1388 = vmatpush.bf16.msra.mxu0 %v1363
      %1389 = vmatmul.bf16.gmra.mxu0 %v1357
      %v1390 = vpop.f32.mrf.mxu0
      %v1391 = vadd.f32 0.0, %v1390
      %v1392 = vpop.f32.mrf.mxu0
      %1393 = vdwg.mxu0
      %1394 = vmatpush.bf16.msra.mxu0 0
      %1395 = vmatpush.bf16.msra.mxu0 0
      %1396 = vmatpush.bf16.msra.mxu0 0
      %1397 = vmatpush.bf16.msra.mxu0 0
      %1398 = vmatpush.bf16.msra.mxu0 0
      %1399 = vmatpush.bf16.msra.mxu0 0
      %1400 = vmatpush.bf16.msra.mxu0 0
      %1401 = vmatpush.bf16.msra.mxu0 %v1366
      %1402 = vmatmul.bf16.gmra.mxu0 %v1357
      %v1403 = vpop.f32.mrf.mxu0
      %v1404 = vadd.f32 0.0, %v1403
      %v1405 = vpop.f32.mrf.mxu0
      %1406 = vdwg.mxu0
      %v1407 = vadd.f32 %v1343, %v1378
      %v1408 = vadd.f32 %v1344, %v1391
      %v1409 = vadd.f32 %v1345, %v1404
      %s1410 = scalar_lea.vmem %s3, 32
      %v1411 = vld [vmem:[%s1410] sm:$0xf]
      %1412 = vrot.lane.b32.xlu0 %v1161, 109
      %v1413 = vpop.permute.xlu0 %1412
      %1414 = vrot.lane.b32.xlu0 %v1162, 109
      %v1415 = vpop.permute.xlu0 %1414
      %1416 = vrot.lane.b32.xlu0 %v1163, 109
      %v1417 = vpop.permute.xlu0 %1416
      %v1418 = vsel %vm792, %v1413, %v1415
      %v1419 = vsel %vm792, %v1415, %v1417
      %v1421 = vsel %vm281, %v1411, 0
      %v1424 = vsel %vm285, %v1418, 0
      %v1427 = vsel %vm285, %v1419, 0
      %v1430 = vsel %vm285, %v1417, 0
      %1432 = vmatpush.bf16.msra.mxu0 0
      %1433 = vmatpush.bf16.msra.mxu0 0
      %1434 = vmatpush.bf16.msra.mxu0 0
      %1435 = vmatpush.bf16.msra.mxu0 0
      %1436 = vmatpush.bf16.msra.mxu0 0
      %1437 = vmatpush.bf16.msra.mxu0 0
      %1438 = vmatpush.bf16.msra.mxu0 0
      %1439 = vmatpush.bf16.msra.mxu0 %v1424
      %1440 = vmatmul.bf16.gmra.mxu0 %v1421
      %v1441 = vpop.f32.mrf.mxu0
      %v1442 = vadd.f32 0.0, %v1441
      %v1443 = vpop.f32.mrf.mxu0
      %1444 = vdwg.mxu0
      %1445 = vmatpush.bf16.msra.mxu0 0
      %1446 = vmatpush.bf16.msra.mxu0 0
      %1447 = vmatpush.bf16.msra.mxu0 0
      %1448 = vmatpush.bf16.msra.mxu0 0
      %1449 = vmatpush.bf16.msra.mxu0 0
      %1450 = vmatpush.bf16.msra.mxu0 0
      %1451 = vmatpush.bf16.msra.mxu0 0
      %1452 = vmatpush.bf16.msra.mxu0 %v1427
      %1453 = vmatmul.bf16.gmra.mxu0 %v1421
      %v1454 = vpop.f32.mrf.mxu0
      %v1455 = vadd.f32 0.0, %v1454
      %v1456 = vpop.f32.mrf.mxu0
      %1457 = vdwg.mxu0
      %1458 = vmatpush.bf16.msra.mxu0 0
      %1459 = vmatpush.bf16.msra.mxu0 0
      %1460 = vmatpush.bf16.msra.mxu0 0
      %1461 = vmatpush.bf16.msra.mxu0 0
      %1462 = vmatpush.bf16.msra.mxu0 0
      %1463 = vmatpush.bf16.msra.mxu0 0
      %1464 = vmatpush.bf16.msra.mxu0 0
      %1465 = vmatpush.bf16.msra.mxu0 %v1430
      %1466 = vmatmul.bf16.gmra.mxu0 %v1421
      %v1467 = vpop.f32.mrf.mxu0
      %v1468 = vadd.f32 0.0, %v1467
      %v1469 = vpop.f32.mrf.mxu0
      %1470 = vdwg.mxu0
      %v1471 = vadd.f32 %v1407, %v1442
      %v1472 = vadd.f32 %v1408, %v1455
      %v1473 = vadd.f32 %v1409, %v1468
      %v1474 = vld [vmem:[%s4] sm:$0xff]
      %1476 = vset.pattern.permute.xlu0 0
      %1477 = vperm.xlu0 %1476, %v1474
      %v1478 = vpop.permute.xlu0 %1477
      %v1480 = vadd.f32 %v1471, %v1478
      %v1481 = vadd.f32 %v1472, %v1478
      %v1482 = vadd.f32 %v1473, %v1478
      %v1483 = vmax.f32 %v1480, 0.0
      %v1484 = vmax.f32 %v1481, 0.0
      %v1485 = vmax.f32 %v1482, 0.0
      %1486 = vst [vmem:[%s251] sm:$0xff] %v1483
      %1487 = vst [vmem:[%s251 + $0x8] sm:$0xff] %v1484
      %vm1488 = vcmask 556032
      %1489 = vst.msk [vmem:[%s251 + $0x10] sm:$0xff] %vm1488, %v1485
      %p1490 = scmp.lt.s32.totalorder %s17, 1
      %s1491 = scalar_select %p1490, %s17, 1
      %s1492 = smul.addr %s1491, 3
      %s1493 = smul.addr %s1492, 8
      %s1494 = scalar_lea.vmem %s6, %s1493
      // Predicated region
      $region45: #{final_conv_block_forward.1} parent=43 // pred_check
        %p1495 = pneg %p166
      $region46: #{final_conv_block_forward.1} parent=43 // pred_check_branch
        %1497 = sbr.rel (%p1495) target = $region48
      $region47: #{final_conv_block_forward.1} parent=43 // pred_region
        _
      $region48: #{final_conv_block_forward.1} parent=43 // pred_fallthru
        _
    $region44: #{final_conv_block_forward.1} parent=5 // pred_fallthru
      _
    %p1498 = scmp.le.s32.totalorder 2, %s12
    // Predicated region
    $region49: #{final_conv_block_forward.1} parent=5 // pred_check
      %p1499 = pneg %p1498
    $region50: #{final_conv_block_forward.1} parent=5 // pred_check_branch
      %1501 = sbr.rel (%p1499) target = $region52
    $region51: #{final_conv_block_forward.1} parent=5 // pred_region
      %s1502 = ssub.s32 %s12, 2
      // Predicated region
      $region53: #{final_conv_block_forward.1} parent=51 // pred_check
        %p1503 = pneg %p172
      $region54: #{final_conv_block_forward.1} parent=51 // pred_check_branch
        %1505 = sbr.rel (%p1503) target = $region56
      $region55: #{final_conv_block_forward.1} parent=51 // pred_region
        %p1506 = scmp.lt.s32.totalorder %s18, 1
        %s1507 = scalar_select %p1506, %s18, 1
        %s1508 = smul.addr %s1507, 3
        %s1509 = smul.addr %s1508, 8
        %s1510 = scalar_lea.vmem %s6, %s1509
      $region56: #{final_conv_block_forward.1} parent=51 // pred_fallthru
        _
    $region52: #{final_conv_block_forward.1} parent=5 // pred_fallthru
      _
  $region6: #{final_conv_block_forward.1} parent=0 // loop_footer
    %s16 = sadd.s32 1, %s12
  $region7: #{final_conv_block_forward.1} parent=0 // loop_footer_branch
    %11 = sbr.rel target = $region3
  $region8: #{final_conv_block_forward.1} parent=0 // loop_exit
    _

</llo_original>
